<compile_context>
chip_gen: v7x
topology: tpu7x:2x2x1
jax: 0.10.0
libtpu: 0.0.40
codegen_flags: <defaults>
</compile_context>

<pallas_src>
import functools

import numpy as np
import jax
import jax.numpy as jnp
from jax import lax
from jax.experimental import pallas as pl
from jax.experimental.pallas import tpu as pltpu

# ----------------------------- configuration --------------------------------
WIDTH_DIV = 8          # channel scale (1 == original widths)
INPUT_HW = 128         # input spatial size (448 == original)
BATCH = 2
EPS = 1e-5             # BatchNorm eps (PyTorch default)
LANE = 128             # TPU lane width; internal channel counts padded to this
VMEM_LIMIT = 48 * 1024 * 1024   # explicit scoped-VMEM budget (< v7x 64 MiB physical)


def _round_up(x, m):
    return (x + m - 1) // m * m


def _pick_tile(n, candidates):
    for c in candidates:
        if n % c == 0:
            return c
    return n


def _pick_rows(m, c, bytes_per_elt=2, cap=2 << 20):
    """Row tile for elementwise kernels: multiple of 8 dividing m, block ~<= 2 MiB."""
    for t in (m, 16384, 8192, 4096, 3584, 2048, 1792, 1024, 896, 512, 448,
              256, 128, 64, 32, 16, 8):
        if t >= 8 and t % 8 == 0 and m % t == 0 and t * c * bytes_per_elt <= cap:
            return t
    return 8


# ----------------------------- fused matmul kernel ---------------------------
def _fused_matmul_kernel(*refs, prologue, act, res):
    """acc += act?(prologue?(A)) @ B ; last K step: epilogue affine + act + residual."""
    a_ref, b_ref = refs[0], refs[1]
    i = 2
    if prologue:
        ps_ref, pb_ref = refs[i], refs[i + 1]
        i += 2
    es_ref, eb_ref = refs[i], refs[i + 1]
    i += 2
    if res is not None:
        r_ref = refs[i]
        i += 1
    o_ref, acc_ref = refs[i], refs[i + 1]

    @pl.when(pl.program_id(2) == 0)
    def _init():
        acc_ref[...] = jnp.zeros_like(acc_ref)

    if prologue:
        a = a_ref[...].astype(jnp.float32)
        a = jnp.maximum(a * ps_ref[...] + pb_ref[...], 0.0)   # pre-activation BN+ReLU
        a = a.astype(jnp.bfloat16)
    else:
        a = a_ref[...]
    acc_ref[...] += jnp.dot(a, b_ref[...], preferred_element_type=jnp.float32)

    @pl.when(pl.program_id(2) == pl.num_programs(2) - 1)
    def _finalize():
        y = acc_ref[...] * es_ref[...] + eb_ref[...]
        if act == "relu":
            y = jnp.maximum(y, 0.0)
        elif act == "sigmoid":
            y = 1.0 / (1.0 + jnp.exp(-y))        # exact sigmoid (feeds (1+mask)*trunk)
        if res == "add":
            y = y + r_ref[...].astype(jnp.float32)
        elif res == "mask":
            y = (1.0 + y) * r_ref[...].astype(jnp.float32)
        o_ref[...] = y.astype(o_ref.dtype)


@functools.partial(jax.jit, static_argnames=("prologue", "act", "res", "out_dtype"))
def _matmul_core(a, b, ps, pb, es, eb, r, *, prologue, act, res, out_dtype):
    M, K = a.shape
    Kp, Np = b.shape                       # weights are pre-padded: Kp, Np % 128 == 0
    a = a.astype(jnp.bfloat16)
    if K != Kp:
        a = jnp.pad(a, ((0, 0), (0, Kp - K)))

    # M tile >= 128 so the MXU rows stay fed; pad M ONCE, straight to the tile.
    tm = min(512, _round_up(M, 128))
    Mp = _round_up(M, tm)
    if Mp != M:
        a = jnp.pad(a, ((0, Mp - M), (0, 0)))
    if r is not None:
        r = r.astype(jnp.bfloat16)
        if Mp != M:
            r = jnp.pad(r, ((0, Mp - M), (0, 0)))

    # Big K tile (usually the whole K -> a single accumulator pass); 256-wide N tile
    # for the 256x256 MXU generations and >=2 parallel N blocks when Cout >= 512.
    tk = Kp if Kp <= 2048 else _pick_tile(Kp, (2048, 1024, 512, 256, 128))
    tn = 256 if Np % 256 == 0 else 128
    # Worst-case VMEM (double-buffered A/B/out/residual + f32 acc) ~8 MiB << limit.

    in_specs = [pl.BlockSpec((tm, tk), lambda i, j, k: (i, k)),
                pl.BlockSpec((tk, tn), lambda i, j, k: (k, j))]
    operands = [a, b]
    if prologue:
        in_specs += [pl.BlockSpec((1, tk), lambda i, j, k: (0, k)),
                     pl.BlockSpec((1, tk), lambda i, j, k: (0, k))]
        operands += [ps, pb]
    in_specs += [pl.BlockSpec((1, tn), lambda i, j, k: (0, j)),
                 pl.BlockSpec((1, tn), lambda i, j, k: (0, j))]
    operands += [es, eb]
    if res is not None:
        in_specs.append(pl.BlockSpec((tm, tn), lambda i, j, k: (i, j)))
        operands.append(r)

    out = pl.pallas_call(
        functools.partial(_fused_matmul_kernel, prologue=prologue, act=act, res=res),
        out_shape=jax.ShapeDtypeStruct((Mp, Np), out_dtype),
        grid_spec=pltpu.PrefetchScalarGridSpec(
            num_scalar_prefetch=0,
            grid=(Mp // tm, Np // tn, Kp // tk),
            in_specs=in_specs,
            out_specs=pl.BlockSpec((tm, tn), lambda i, j, k: (i, j)),
            scratch_shapes=[pltpu.VMEM((tm, tn), jnp.float32)]),
        compiler_params=pltpu.CompilerParams(
            dimension_semantics=("parallel", "parallel", "arbitrary"),
            vmem_limit_bytes=VMEM_LIMIT),
    )(*operands)
    if Mp != M:
        out = out[:M]
    return out


def matmul_fused(a, b, *, prologue=None, epilogue=None, act=None,
                 residual=None, res_mode=None, out_dtype=jnp.bfloat16):
    """act((prologue-relu(a)) @ b * scale + bias) [+ r | (1+.)*r]; b pre-padded bf16."""
    Kp, Np = b.shape
    if epilogue is None:
        es = jnp.ones((1, Np), jnp.float32)
        eb = jnp.zeros((1, Np), jnp.float32)
    else:
        es, eb = epilogue
    if prologue is not None:
        ps, pb = prologue
        assert a.shape[1] == Kp, "prologue fusion requires unpadded K == Kp"
    else:
        ps = pb = None
    assert (residual is None) == (res_mode is None)
    return _matmul_core(a, b, ps, pb, es, eb, residual,
                        prologue=prologue is not None, act=act, res=res_mode,
                        out_dtype=out_dtype)


# ----------------------------- fused 3x3 stride-1 conv kernel ----------------
def _conv3x3_kernel(x_ref, w_ref, es_ref, eb_ref, o_ref, acc_ref, *, n_hblk, th, act):
    """Direct 3x3 / stride-1 conv: 9 taps accumulated on the MXU, BN+act epilogue.

    x_ref: full padded (B, H+2, W+2, Cp) activation resident in VMEM.
    w_ref: (9*Cp, Coutp) weight (tap-major rows), resident.
    o_ref: (th*Wo, Coutp) block of the flattened (B*H*W, Coutp) output.
    """
    m = pl.program_id(0)
    b = m // n_hblk
    h0 = (m % n_hblk) * th
    wo = x_ref.shape[2] - 2
    cp = x_ref.shape[3]

    acc_ref[...] = jnp.zeros_like(acc_ref)
    for t in range(9):
        i, j = divmod(t, 3)
        a = x_ref[pl.ds(b, 1), pl.ds(h0 + i, th), pl.ds(j, wo), :]   # (1, th, wo, cp)
        a = a.reshape(th * wo, cp)
        wt = w_ref[pl.ds(t * cp, cp), :]                             # (cp, coutp)
        acc_ref[...] += jnp.dot(a, wt, preferred_element_type=jnp.float32)

    y = acc_ref[...] * es_ref[...] + eb_ref[...]
    if act == "relu":
        y = jnp.maximum(y, 0.0)
    elif act == "sigmoid":
        y = 1.0 / (1.0 + jnp.exp(-y))
    o_ref[...] = y.astype(o_ref.dtype)


def _pick_conv_th(ho, wo, row_cap=2048):
    """Largest th dividing ho with th*wo a multiple of 8 and <= ~row_cap rows."""
    for th in range(min(ho, max(1, row_cap // max(wo, 1))), 0, -1):
        if ho % th == 0 and (th * wo) % 8 == 0:
            return th
    return None


@functools.partial(jax.jit, static_argnames=("act", "out_dtype"))
def _conv3x3_s1_core(x_pad, w, es, eb, *, act, out_dtype):
    B, Hp, Wp, Cp = x_pad.shape
    Ho, Wo = Hp - 2, Wp - 2
    K, Coutp = w.shape
    th = _pick_conv_th(Ho, Wo)
    n_hblk = Ho // th
    kernel = functools.partial(_conv3x3_kernel, n_hblk=n_hblk, th=th, act=act)
    out = pl.pallas_call(
        kernel,
        out_shape=jax.ShapeDtypeStruct((B * Ho * Wo, Coutp), out_dtype),
        grid_spec=pltpu.PrefetchScalarGridSpec(
            num_scalar_prefetch=0,
            grid=(B * n_hblk,),
            in_specs=[
                # whole padded activation, constant index_map -> stays resident
                pl.BlockSpec((B, Hp, Wp, Cp), lambda m: (0, 0, 0, 0)),
                pl.BlockSpec((K, Coutp), lambda m: (0, 0)),
                pl.BlockSpec((1, Coutp), lambda m: (0, 0)),
                pl.BlockSpec((1, Coutp), lambda m: (0, 0)),
            ],
            out_specs=pl.BlockSpec((th * Wo, Coutp), lambda m: (m, 0)),
            scratch_shapes=[pltpu.VMEM((th * Wo, Coutp), jnp.float32)]),
        compiler_params=pltpu.CompilerParams(
            dimension_semantics=("parallel",),
            vmem_limit_bytes=VMEM_LIMIT),
    )(x_pad, w, es, eb)
    return out


# ----------------------------- elementwise kernels ---------------------------
def _addn_kernel(*refs):
    *xs, o_ref = refs
    acc = xs[0][...].astype(jnp.float32)
    for r in xs[1:]:
        acc = acc + r[...].astype(jnp.float32)
    o_ref[...] = acc.astype(o_ref.dtype)


@jax.jit
def _addn_2d(*xs):
    M, C = xs[0].shape
    Mp = _round_up(M, 8)
    if Mp != M:
        xs = [jnp.pad(x, ((0, Mp - M), (0, 0))) for x in xs]
    tr = _pick_rows(Mp, C)
    n = len(xs)
    out = pl.pallas_call(
        _addn_kernel,
        out_shape=jax.ShapeDtypeStruct((Mp, C), xs[0].dtype),
        grid_spec=pltpu.PrefetchScalarGridSpec(
            num_scalar_prefetch=0,
            grid=(Mp // tr,),
            in_specs=[pl.BlockSpec((tr, C), lambda i: (i, 0)) for _ in range(n)],
            out_specs=pl.BlockSpec((tr, C), lambda i: (i, 0))),
        compiler_params=pltpu.CompilerParams(
            dimension_semantics=("parallel",),
            vmem_limit_bytes=VMEM_LIMIT),
    )(*xs)
    return out[:M] if Mp != M else out


def pallas_add(*xs):
    """Fused n-way elementwise add on NHWC tensors (lane-dense channels)."""
    shape = xs[0].shape
    flat = [x.reshape(-1, shape[-1]) for x in xs]
    return _addn_2d(*flat).reshape(shape)


def _affine_act_kernel(x_ref, s_ref, b_ref, o_ref, *, act):
    y = x_ref[...].astype(jnp.float32) * s_ref[...] + b_ref[...]
    if act == "relu":
        y = jnp.maximum(y, 0.0)
    o_ref[...] = y.astype(o_ref.dtype)


@functools.partial(jax.jit, static_argnames=("act",))
def _affine_act_2d(x, s, b, act):
    M, C = x.shape
    Mp = _round_up(M, 8)
    if Mp != M:
        x = jnp.pad(x, ((0, Mp - M), (0, 0)))
    tr = _pick_rows(Mp, C)
    out = pl.pallas_call(
        functools.partial(_affine_act_kernel, act=act),
        out_shape=jax.ShapeDtypeStruct((Mp, C), x.dtype),
        grid_spec=pltpu.PrefetchScalarGridSpec(
            num_scalar_prefetch=0,
            grid=(Mp // tr,),
            in_specs=[pl.BlockSpec((tr, C), lambda i: (i, 0)),
                      pl.BlockSpec((1, C), lambda i: (0, 0)),
                      pl.BlockSpec((1, C), lambda i: (0, 0))],
            out_specs=pl.BlockSpec((tr, C), lambda i: (i, 0))),
        compiler_params=pltpu.CompilerParams(
            dimension_semantics=("parallel",),
            vmem_limit_bytes=VMEM_LIMIT),
    )(x, s, b)
    return out[:M] if Mp != M else out


# ----------------------------- NN building blocks (NHWC, channel-padded) -----
def conv2d_fused(x, conv, *, stride=1, pad=0, prologue=None, epilogue=None,
                 act=None, residual=None, res_mode=None, out_dtype=jnp.bfloat16):
    """x: (B,H,W,Cp) bf16 (Cp lane-padded, or 3 for the stem); conv['w']: (Kp, Coutp)."""
    w = conv["w"]
    k = conv["k"]
    B, H, W, C = x.shape

    # --- fused direct path: 3x3, stride 1 (dominant conv in the network) ---------
    if (k == 3 and stride == 1 and pad == 1 and prologue is None and residual is None
            and C % LANE == 0 and w.shape[0] == 9 * C):
        Ho, Wo = H, W
        th = _pick_conv_th(Ho, Wo)
        xpad_bytes = B * (H + 2) * (W + 2) * C * 2
        if th is not None and xpad_bytes <= 12 * 1024 * 1024:
            Coutp = w.shape[1]
            if epilogue is None:
                es = jnp.ones((1, Coutp), jnp.float32)
                eb = jnp.zeros((1, Coutp), jnp.float32)
            else:
                es, eb = epilogue
            x_pad = jnp.pad(x, ((0, 0), (1, 1), (1, 1), (0, 0)))
            out = _conv3x3_s1_core(x_pad, w, es, eb, act=act, out_dtype=out_dtype)
            return out.reshape(B, Ho, Wo, Coutp)

    # --- generic path: 1x1 convs direct; k>1 stride>1 convs via im2col -----------
    if k == 1:
        xs = x[:, ::stride, ::stride, :] if stride > 1 else x
        Ho, Wo = xs.shape[1], xs.shape[2]
        cols = xs.reshape(B * Ho * Wo, C)
    else:
        xp = jnp.pad(x, ((0, 0), (pad, pad), (pad, pad), (0, 0)))
        Ho = (H + 2 * pad - k) // stride + 1
        Wo = (W + 2 * pad - k) // stride + 1
        pieces = [xp[:, i:i + stride * Ho:stride, j:j + stride * Wo:stride, :]
                  for i in range(k) for j in range(k)]
        cols = jnp.concatenate(pieces, axis=-1).reshape(B * Ho * Wo, k * k * C)
    r2d = None if residual is None else residual.reshape(B * Ho * Wo, -1)
    out = matmul_fused(cols, w, prologue=prologue, epilogue=epilogue, act=act,
                       residual=r2d, res_mode=res_mode, out_dtype=out_dtype)
    return out.reshape(B, Ho, Wo, w.shape[1])


def batchnorm_relu(x, bn):
    B, H, W, C = x.shape
    s, b = bn
    return _affine_act_2d(x.reshape(-1, C), s, b, "relu").reshape(B, H, W, C)


def maxpool_3x3_s2_p1(x):
    return lax.reduce_window(x, jnp.array(-jnp.inf, x.dtype), lax.max,
                             (1, 3, 3, 1), (1, 2, 2, 1),
                             [(0, 0), (1, 1), (1, 1), (0, 0)])


def _interp_matrix(out_size, in_size):
    """align_corners=True bilinear interpolation matrix (out_size, in_size), static."""
    m = np.zeros((out_size, in_size), np.float32)
    if out_size == 1 or in_size == 1:
        m[:, 0] = 1.0
        return jnp.asarray(m)
    s = np.arange(out_size, dtype=np.float64) * ((in_size - 1) / (out_size - 1))
    i0 = np.minimum(np.floor(s).astype(np.int64), in_size - 1)
    i1 = np.minimum(i0 + 1, in_size - 1)
    w1 = (s - i0).astype(np.float32)
    rows = np.arange(out_size)
    m[rows, i0] += 1.0 - w1
    m[rows, i1] += w1
    return jnp.asarray(m)


def upsample_bilinear_align_corners(x, out_h, out_w):
    """nn.UpsamplingBilinear2d via two interpolation-matrix contractions (bf16 MXU)."""
    B, H, W, C = x.shape
    if (H, W) == (out_h, out_w):
        return x
    my = _interp_matrix(out_h, H).astype(jnp.bfloat16)
    mx = _interp_matrix(out_w, W).astype(jnp.bfloat16)
    y = jnp.einsum("oh,bhwc->bowc", my, x)
    y = jnp.einsum("pw,bowc->bopc", mx, y)
    return y.astype(x.dtype)


# ----------------------------- parameters ------------------------------------
class ParamGen:
    def __init__(self, key):
        self.key = key

    def take(self):
        self.key, sub = jax.random.split(self.key)
        return sub

    def conv(self, cin, cout, k):
        fan_in = cin * k * k
        std = 0.25 * (2.0 / fan_in) ** 0.5   # scaled-down He init for numerical sanity
        return jax.random.normal(self.take(), (cout, cin, k, k), jnp.float32) * std

    def bn(self, c):
        return {"gamma": jnp.ones((c,), jnp.float32),
                "beta": jnp.zeros((c,), jnp.float32),
                "mean": jnp.zeros((c,), jnp.float32),
                "var": jnp.ones((c,), jnp.float32)}

    def linear(self, cin, cout):
        std = (1.0 / cin) ** 0.5
        return (jax.random.normal(self.take(), (cout, cin), jnp.float32) * std,
                jax.random.normal(self.take(), (cout,), jnp.float32) * std)


def prep_conv_w(w, cin_pad):
    """(cout,cin,k,k) f32 -> lane-padded (Kp, Coutp) bf16 matmul weight (tap-major)."""
    cout, cin, kh, kw = w.shape
    coutp = _round_up(cout, LANE)
    w = jnp.pad(w, ((0, coutp - cout), (0, cin_pad - cin), (0, 0), (0, 0)))
    wmat = jnp.transpose(w, (2, 3, 1, 0)).reshape(kh * kw * cin_pad, coutp)
    K = kh * kw * cin_pad
    Kp = _round_up(K, LANE)
    if Kp != K:
        wmat = jnp.pad(wmat, ((0, Kp - K), (0, 0)))
    return wmat.astype(jnp.bfloat16)


def prep_bn(bn, cpad):
    """Eval-mode BN -> padded (scale, bias) rows, f32 (padded channels scale=bias=0)."""
    scale = bn["gamma"] / jnp.sqrt(bn["var"] + EPS)
    bias = bn["beta"] - bn["mean"] * scale
    c = scale.shape[0]
    scale = jnp.pad(scale, (0, cpad - c)).reshape(1, cpad).astype(jnp.float32)
    bias = jnp.pad(bias, (0, cpad - c)).reshape(1, cpad).astype(jnp.float32)
    return scale, bias


def prep_fc(w, b, cinp):
    cout, cin = w.shape
    coutp = _round_up(cout, LANE)
    wmat = jnp.pad(w.T, ((0, cinp - cin), (0, coutp - cout))).astype(jnp.bfloat16)
    return {"w": wmat, "b": b, "cout": cout}


def residual_block_params(pg, cin, cout, stride=1):
    cinp = _round_up(cin, LANE)
    mid = max(cout // 4, 1)
    midp = _round_up(mid, LANE)
    p = {"stride": stride,
         "bn1": prep_bn(pg.bn(cin), cinp),
         "conv1": {"w": prep_conv_w(pg.conv(cin, mid, 1), cinp), "k": 1},
         "bn2": prep_bn(pg.bn(mid), midp),
         "conv2": {"w": prep_conv_w(pg.conv(mid, mid, 3), midp), "k": 3},
         "bn3": prep_bn(pg.bn(mid), midp),
         "conv3": {"w": prep_conv_w(pg.conv(mid, cout, 1), midp), "k": 1}}
    if cin != cout or stride != 1:
        p["conv4"] = {"w": prep_conv_w(pg.conv(cin, cout, 1), cinp), "k": 1}
    return p


def attention_params(pg, ch, levels):
    chp = _round_up(ch, LANE)
    p = {"levels": levels,
         "first": residual_block_params(pg, ch, ch),
         "trunk": [residual_block_params(pg, ch, ch) for _ in range(2)],
         "down": [], "skip": [], "up": [],
         "mask_bn1": prep_bn(pg.bn(ch), chp),
         "mask_conv1": {"w": prep_conv_w(pg.conv(ch, ch, 1), chp), "k": 1},
         "mask_bn2": prep_bn(pg.bn(ch), chp),
         "mask_conv2": {"w": prep_conv_w(pg.conv(ch, ch, 1), chp), "k": 1},
         "last": residual_block_params(pg, ch, ch)}
    for l in range(levels):
        if l < levels - 1:
            p["down"].append([residual_block_params(pg, ch, ch)])
            p["skip"].append(residual_block_params(pg, ch, ch))
        else:
            p["down"].append([residual_block_params(pg, ch, ch) for _ in range(2)])
    for _ in range(levels - 1):
        p["up"].append(residual_block_params(pg, ch, ch))
    return p


def build_model_params(pg, wd=WIDTH_DIV):
    c = lambda n: max(n // wd, 1)
    P = {}
    P["conv1"] = {"w": prep_conv_w(pg.conv(3, c(64), 7), 3), "k": 7}
    P["conv1_bn"] = prep_bn(pg.bn(c(64)), _round_up(c(64), LANE))
    P["rb0"] = residual_block_params(pg, c(64), c(128))
    P["att0"] = attention_params(pg, c(128), 4)     # AttentionModule_stage0
    P["rb1"] = residual_block_params(pg, c(128), c(256), 2)
    P["att1"] = attention_params(pg, c(256), 3)     # AttentionModule_stage1
    P["rb2"] = residual_block_params(pg, c(256), c(512), 2)
    P["att2"] = attention_params(pg, c(512), 2)     # AttentionModule_stage2
    P["att2_2"] = attention_params(pg, c(512), 2)
    P["rb3"] = residual_block_params(pg, c(512), c(1024), 2)
    P["att3"] = attention_params(pg, c(1024), 1)    # AttentionModule_stage3
    P["att3_2"] = attention_params(pg, c(1024), 1)
    P["att3_3"] = attention_params(pg, c(1024), 1)
    P["rb4"] = residual_block_params(pg, c(1024), c(2048), 2)
    P["rb5"] = residual_block_params(pg, c(2048), c(2048))
    P["rb6"] = residual_block_params(pg, c(2048), c(2048))
    P["mpool2_bn"] = prep_bn(pg.bn(c(2048)), _round_up(c(2048), LANE))
    w, b = pg.linear(c(2048), 10)
    P["fc"] = prep_fc(w, b, _round_up(c(2048), LANE))
    return P


# ----------------------------- forward pieces --------------------------------
def residual_block(x, p):
    """Pre-activation bottleneck; BN/ReLU and the residual add are fused into the
    conv kernels (prologue bn1, epilogue bn2/bn3, conv3 += residual)."""
    stride = p["stride"]
    out = conv2d_fused(x, p["conv1"], prologue=p["bn1"], epilogue=p["bn2"], act="relu")
    out = conv2d_fused(out, p["conv2"], stride=stride, pad=1,
                       epilogue=p["bn3"], act="relu")
    if "conv4" in p:
        residual = conv2d_fused(x, p["conv4"], stride=stride, prologue=p["bn1"])
    else:
        residual = x
    return conv2d_fused(out, p["conv3"], residual=residual, res_mode="add")


def attention_module(x, p):
    levels = p["levels"]
    x = residual_block(x, p["first"])
    trunk = x
    for rb in p["trunk"]:
        trunk = residual_block(trunk, rb)
    # soft-mask branch: down path (hourglass)
    feats, skips = [], []
    cur = x
    for l in range(levels):
        cur = maxpool_3x3_s2_p1(cur)
        for rb in p["down"][l]:
            cur = residual_block(cur, rb)
        feats.append(cur)
        if l < levels - 1:
            skips.append(residual_block(cur, p["skip"][l]))
    # up path
    up = feats[-1]
    for l in range(levels - 2, -1, -1):
        u = upsample_bilinear_align_corners(up, feats[l].shape[1], feats[l].shape[2])
        up = pallas_add(u, feats[l], skips[l])
        up = residual_block(up, p["up"][l])
    u = upsample_bilinear_align_corners(up, trunk.shape[1], trunk.shape[2])
    out_interp1 = pallas_add(u, trunk)
    # mask head: BN-ReLU-conv1x1-BN-ReLU-conv1x1-sigmoid, then (1 + mask) * trunk,
    # all fused into the two 1x1-conv matmul kernels.
    m = conv2d_fused(out_interp1, p["mask_conv1"],
                     prologue=p["mask_bn1"], epilogue=p["mask_bn2"], act="relu")
    out = conv2d_fused(m, p["mask_conv2"], act="sigmoid",
                       residual=trunk, res_mode="mask")
    return residual_block(out, p["last"])


def model_forward(x_nchw, P):
    # layout: public input is NCHW (PyTorch); internal compute is NHWC bf16 with
    # channels padded to a multiple of 128 (lane-dense).
    x = jnp.transpose(x_nchw, (0, 2, 3, 1)).astype(jnp.bfloat16)
    out = conv2d_fused(x, P["conv1"], stride=2, pad=3,
                       epilogue=P["conv1_bn"], act="relu")
    out = maxpool_3x3_s2_p1(out)
    out = residual_block(out, P["rb0"])
    out = attention_module(out, P["att0"])
    out = residual_block(out, P["rb1"])
    out = attention_module(out, P["att1"])
    out = residual_block(out, P["rb2"])
    out = attention_module(out, P["att2"])
    out = attention_module(out, P["att2_2"])
    out = residual_block(out, P["rb3"])
    out = attention_module(out, P["att3"])
    out = attention_module(out, P["att3_2"])
    out = attention_module(out, P["att3_3"])
    out = residual_block(out, P["rb4"])
    out = residual_block(out, P["rb5"])
    out = residual_block(out, P["rb6"])
    # mpool2: BN -> ReLU -> AvgPool2d(kernel_size=7, stride=1) == full-extent average
    out = batchnorm_relu(out, P["mpool2_bn"])
    pooled = jnp.mean(out.astype(jnp.float32), axis=(1, 2))      # (B, Cp)
    logits = matmul_fused(pooled, P["fc"]["w"], out_dtype=jnp.float32)
    logits = logits[:, :P["fc"]["cout"]] + P["fc"]["b"]
    return logits


# ----------------------------- main -------------------------------------------
if __name__ == "__main__":
    root = jax.random.PRNGKey(0)
    k_params, k_input = jax.random.split(root)

    # --- fused matmul self-check against an XLA reference (same bf16 operands) ---
    ka, kw_, ks, kb = jax.random.split(jax.random.PRNGKey(1), 4)
    a = jax.random.normal(ka, (192, 200), jnp.float32)
    w = jax.random.normal(kw_, (200, 130), jnp.float32) * 0.1
    s = jax.random.normal(ks, (130,), jnp.float32)
    bb = jax.random.normal(kb, (130,), jnp.float32)
    Kp, Np = _round_up(200, LANE), _round_up(130, LANE)
    w_pad = jnp.pad(w, ((0, Kp - 200), (0, Np - 130))).astype(jnp.bfloat16)
    es = jnp.pad(s, (0, Np - 130)).reshape(1, Np)
    eb = jnp.pad(bb, (0, Np - 130)).reshape(1, Np)
    got = matmul_fused(a, w_pad, epilogue=(es, eb), act="relu",
                       out_dtype=jnp.float32)[:, :130]
    a_bf = a.astype(jnp.bfloat16).astype(jnp.float32)
    w_bf = w.astype(jnp.bfloat16).astype(jnp.float32)
    ref = jnp.maximum(jnp.dot(a_bf, w_bf, precision=lax.Precision.HIGHEST) * s + bb, 0.0)
    assert bool(jnp.allclose(got, ref, rtol=1e-3, atol=1e-3)), \
        "fused matmul self-check failed"

    # --- fused 3x3/stride-1 conv self-check against an XLA conv reference --------
    kc1, kc2 = jax.random.split(jax.random.PRNGKey(2))
    xc = jax.random.normal(kc1, (2, 16, 16, 128), jnp.float32)
    wc = jax.random.normal(kc2, (128, 128, 3, 3), jnp.float32) * 0.05
    conv_p = {"w": prep_conv_w(wc, 128), "k": 3}
    got_c = conv2d_fused(xc.astype(jnp.bfloat16), conv_p, stride=1, pad=1,
                         out_dtype=jnp.float32)
    xc_bf = xc.astype(jnp.bfloat16).astype(jnp.float32)
    wc_bf = wc.astype(jnp.bfloat16).astype(jnp.float32)
    ref_c = lax.conv_general_dilated(
        xc_bf, jnp.transpose(wc_bf, (2, 3, 1, 0)),
        window_strides=(1, 1), padding=((1, 1), (1, 1)),
        dimension_numbers=("NHWC", "HWIO", "NHWC"),
        precision=lax.Precision.HIGHEST)
    assert got_c.shape == ref_c.shape, (got_c.shape, ref_c.shape)
    assert bool(jnp.allclose(got_c, ref_c, rtol=1e-2, atol=1e-2)), \
        "fused conv3x3 self-check failed"

    # --- full model forward ---
    pg = ParamGen(k_params)
    params = build_model_params(pg)

    x = jax.random.normal(k_input, (BATCH, 3, INPUT_HW, INPUT_HW), jnp.float32)  # NCHW
    logits = model_forward(x, params)
    logits = jax.block_until_ready(logits)

    assert logits.shape == (BATCH, 10), logits.shape
    assert bool(jnp.all(jnp.isfinite(logits)))
    print("KERNEL_OK")
</pallas_src>

<mosaic_0001>
module attributes {stable_mosaic.version = 11 : i64} {
  func.func @_fused_matmul_kernel(%arg0: i32, %arg1: i32, %arg2: i32, %arg3: memref<256x256xbf16, #tpu.memory_space<vmem>>, %arg4: memref<256x256xbf16, #tpu.memory_space<vmem>>, %arg5: memref<1x256xf32, #tpu.memory_space<vmem>>, %arg6: memref<1x256xf32, #tpu.memory_space<vmem>>, %arg7: memref<256x256xf32, #tpu.memory_space<vmem>>, %arg8: memref<256x256xf32, #tpu.memory_space<vmem>>) attributes {dimension_semantics = [#tpu.dimension_semantics<parallel>, #tpu.dimension_semantics<parallel>, #tpu.dimension_semantics<arbitrary>], iteration_bounds = array<i64: 1, 1, 1>, scalar_prefetch = 0 : i64, scratch_operands = 1 : i64, tpu.core_type = #tpu.core_type<tc>, window_params = [{transform_indices = @transform_0, window_bounds = array<i64: 256, 256>}, {transform_indices = @transform_1, window_bounds = array<i64: 256, 256>}, {transform_indices = @transform_2, window_bounds = array<i64: 1, 256>}, {transform_indices = @transform_3, window_bounds = array<i64: 1, 256>}, {transform_indices = @transform_4, window_bounds = array<i64: 256, 256>}]} {
    %c0_i32 = arith.constant 0 : i32
    %0 = arith.cmpi eq, %arg2, %c0_i32 : i32
    %1 = arith.extui %0 : i1 to i32
    %c0_i32_0 = arith.constant 0 : i32
    %2 = arith.cmpi ne, %1, %c0_i32_0 : i32
    scf.if %2 {
      %cst_10 = arith.constant 0.000000e+00 : f32
      %12 = vector.broadcast %cst_10 : f32 to vector<256x256xf32>
      %c0_11 = arith.constant 0 : index
      %c0_12 = arith.constant 0 : index
      %13 = vector.load %arg8[%c0_11, %c0_12] : memref<256x256xf32, #tpu.memory_space<vmem>>, vector<256x256xf32>
      tpu.vector_store %arg8[%c0_11, %c0_12], %12 {strides = array<i32>} : memref<256x256xf32, #tpu.memory_space<vmem>>, vector<256x256xf32>,
    } else {
    }
    %c0 = arith.constant 0 : index
    %c0_1 = arith.constant 0 : index
    %3 = vector.load %arg3[%c0, %c0_1] : memref<256x256xbf16, #tpu.memory_space<vmem>>, vector<256x256xbf16>
    %c0_2 = arith.constant 0 : index
    %c0_3 = arith.constant 0 : index
    %4 = vector.load %arg8[%c0_2, %c0_3] : memref<256x256xf32, #tpu.memory_space<vmem>>, vector<256x256xf32>
    %c0_4 = arith.constant 0 : index
    %c0_5 = arith.constant 0 : index
    %5 = vector.load %arg4[%c0_4, %c0_5] : memref<256x256xbf16, #tpu.memory_space<vmem>>, vector<256x256xbf16>
    %cst = arith.constant dense<0.000000e+00> : vector<256x256xf32>
    %6 = tpu.matmul %3, %5, %cst {dimension_numbers = #tpu.dot_dimension_numbers<[1], [0], [0], [1], [0, 0, 1, 1], [], []>} : vector<256x256xbf16>, vector<256x256xbf16>, vector<256x256xf32> -> vector<256x256xf32>
    %7 = arith.addf %4, %6 : vector<256x256xf32>
    %c0_6 = arith.constant 0 : index
    %c0_7 = arith.constant 0 : index
    %8 = vector.load %arg8[%c0_6, %c0_7] : memref<256x256xf32, #tpu.memory_space<vmem>>, vector<256x256xf32>
    tpu.vector_store %arg8[%c0_6, %c0_7], %7 {strides = array<i32>} : memref<256x256xf32, #tpu.memory_space<vmem>>, vector<256x256xf32>,
    %c0_i32_8 = arith.constant 0 : i32
    %9 = arith.cmpi eq, %arg2, %c0_i32_8 : i32
    %10 = arith.extui %9 : i1 to i32
    %c0_i32_9 = arith.constant 0 : i32
    %11 = arith.cmpi ne, %10, %c0_i32_9 : i32
    scf.if %11 {
      %c0_10 = arith.constant 0 : index
      %c0_11 = arith.constant 0 : index
      %12 = vector.load %arg8[%c0_10, %c0_11] : memref<256x256xf32, #tpu.memory_space<vmem>>, vector<256x256xf32>
      %c0_12 = arith.constant 0 : index
      %c0_13 = arith.constant 0 : index
      %13 = vector.load %arg5[%c0_12, %c0_13] : memref<1x256xf32, #tpu.memory_space<vmem>>, vector<1x256xf32>
      %14 = vector.broadcast %13 : vector<1x256xf32> to vector<256x256xf32>
      %15 = arith.mulf %12, %14 : vector<256x256xf32>
      %c0_14 = arith.constant 0 : index
      %c0_15 = arith.constant 0 : index
      %16 = vector.load %arg6[%c0_14, %c0_15] : memref<1x256xf32, #tpu.memory_space<vmem>>, vector<1x256xf32>
      %17 = vector.broadcast %16 : vector<1x256xf32> to vector<256x256xf32>
      %18 = arith.addf %15, %17 : vector<256x256xf32>
      %cst_16 = arith.constant 0.000000e+00 : f32
      %19 = vector.broadcast %cst_16 : f32 to vector<256x256xf32>
      %20 = arith.maximumf %18, %19 : vector<256x256xf32>
      %c0_17 = arith.constant 0 : index
      %c0_18 = arith.constant 0 : index
      %21 = vector.load %arg7[%c0_17, %c0_18] : memref<256x256xf32, #tpu.memory_space<vmem>>, vector<256x256xf32>
      tpu.vector_store %arg7[%c0_17, %c0_18], %20 {strides = array<i32>} : memref<256x256xf32, #tpu.memory_space<vmem>>, vector<256x256xf32>,
    } else {
    }
    return
  }
  func.func @transform_0(%arg0: i32, %arg1: i32, %arg2: i32) -> (i32, i32) {
    %c0_i32 = arith.constant 0 : i32
    return %arg0, %arg2 : i32, i32
  }
  func.func @transform_1(%arg0: i32, %arg1: i32, %arg2: i32) -> (i32, i32) {
    %c0_i32 = arith.constant 0 : i32
    return %arg2, %arg1 : i32, i32
  }
  func.func @transform_2(%arg0: i32, %arg1: i32, %arg2: i32) -> (i32, i32) {
    %c0_i32 = arith.constant 0 : i32
    %c0_i32_0 = arith.constant 0 : i32
    return %c0_i32, %arg1 : i32, i32
  }
  func.func @transform_3(%arg0: i32, %arg1: i32, %arg2: i32) -> (i32, i32) {
    %c0_i32 = arith.constant 0 : i32
    %c0_i32_0 = arith.constant 0 : i32
    return %c0_i32, %arg1 : i32, i32
  }
  func.func @transform_4(%arg0: i32, %arg1: i32, %arg2: i32) -> (i32, i32) {
    %c0_i32 = arith.constant 0 : i32
    return %arg0, %arg1 : i32, i32
  }
}

</mosaic_0001>

<llo_original>
// kernel: _matmul_core.1
$region0: #{_matmul_core.1}
  #allocation0 [shape = 'u32[]', space=smem, size = 0x4, offset = 0x4, fixed_abs, tag = 'smem constant byte address 0x4 - core index']
  #allocation1 [shape = 'u32[144,128]{1,0:T(1,128)}', space=vmem, size = 0x12000, scoped, tag = 'internal scratch']
  #allocation2 [shape = 'f32[256,256]{1,0:T(8,128)}', space=vmem, size = 0x40000, scoped, tag = 'scratch operand']
  %s0 = inlined_call_operand.vmem [shape: bf16[256,256], index: 0, kind: input, shape index: {}]
  %s1 = inlined_call_operand.vmem [shape: bf16[256,256], index: 1, kind: input, shape index: {}]
  %s2 = inlined_call_operand.vmem [shape: f32[1,256], index: 2, kind: input, shape index: {}]
  %s3 = inlined_call_operand.vmem [shape: f32[1,256], index: 3, kind: input, shape index: {}]
  %s4 = inlined_call_operand.vmem [shape: f32[256,256], index: 4, kind: output, shape index: {}]
  %s5 = sld [smem:[#allocation0]]
  $region34: #{_matmul_core.1} parent=0
    _
  %s7 = ssub.s32 1, %s5
  %s8 = scalar_select 0, %s7, %s5
  // Predicated region
  $region2: #{_matmul_core.1} parent=0 // pred_check
    _
  $region3: #{_matmul_core.1} parent=0 // pred_check_branch
    %10 = sbr.rel (0) target = $region5
  $region4: #{_matmul_core.1} parent=0 // pred_region
    _
  $region5: #{_matmul_core.1} parent=0 // pred_fallthru
    _
  // Predicated region
  $region6: #{_matmul_core.1} parent=0 // pred_check
    _
  $region7: #{_matmul_core.1} parent=0 // pred_check_branch
    %12 = sbr.rel (0) target = $region9
  $region8: #{_matmul_core.1} parent=0 // pred_region
    _
  $region9: #{_matmul_core.1} parent=0 // pred_fallthru
    _
  // Predicated region
  $region10: #{_matmul_core.1} parent=0 // pred_check
    _
  $region11: #{_matmul_core.1} parent=0 // pred_check_branch
    %14 = sbr.rel (0) target = $region13
  $region12: #{_matmul_core.1} parent=0 // pred_region
    _
  $region13: #{_matmul_core.1} parent=0 // pred_fallthru
    _
  // Predicated region
  $region14: #{_matmul_core.1} parent=0 // pred_check
    _
  $region15: #{_matmul_core.1} parent=0 // pred_check_branch
    %16 = sbr.rel (0) target = $region17
  $region16: #{_matmul_core.1} parent=0 // pred_region
    _
  $region17: #{_matmul_core.1} parent=0 // pred_fallthru
    _
  %p17 = scmp.eq.s32.totalorder 0, 0
  // Predicated region
  $region18: #{_matmul_core.1} parent=0 // pred_check
    %p18 = pneg %p17
  $region19: #{_matmul_core.1} parent=0 // pred_check_branch
    %20 = sbr.rel (%p18) target = $region21
  $region20: #{_matmul_core.1} parent=0 // pred_region
    %21 = vst [vmem:[#allocation2] sm:$0xff] 0.0
    %22 = vst [vmem:[#allocation2 + $0x8] sm:$0xff] 0.0
    %23 = vst [vmem:[#allocation2 + $0x10] sm:$0xff] 0.0
    %24 = vst [vmem:[#allocation2 + $0x18] sm:$0xff] 0.0
    %25 = vst [vmem:[#allocation2 + $0x20] sm:$0xff] 0.0
    %26 = vst [vmem:[#allocation2 + $0x28] sm:$0xff] 0.0
    %27 = vst [vmem:[#allocation2 + $0x30] sm:$0xff] 0.0
    %28 = vst [vmem:[#allocation2 + $0x38] sm:$0xff] 0.0
    %29 = vst [vmem:[#allocation2 + $0x40] sm:$0xff] 0.0
    %30 = vst [vmem:[#allocation2 + $0x48] sm:$0xff] 0.0
    %31 = vst [vmem:[#allocation2 + $0x50] sm:$0xff] 0.0
    %32 = vst [vmem:[#allocation2 + $0x58] sm:$0xff] 0.0
    %33 = vst [vmem:[#allocation2 + $0x60] sm:$0xff] 0.0
    %34 = vst [vmem:[#allocation2 + $0x68] sm:$0xff] 0.0
    %35 = vst [vmem:[#allocation2 + $0x70] sm:$0xff] 0.0
    %36 = vst [vmem:[#allocation2 + $0x78] sm:$0xff] 0.0
    %37 = vst [vmem:[#allocation2 + $0x80] sm:$0xff] 0.0
    %38 = vst [vmem:[#allocation2 + $0x88] sm:$0xff] 0.0
    %39 = vst [vmem:[#allocation2 + $0x90] sm:$0xff] 0.0
    %40 = vst [vmem:[#allocation2 + $0x98] sm:$0xff] 0.0
    %41 = vst [vmem:[#allocation2 + $0xa0] sm:$0xff] 0.0
    %42 = vst [vmem:[#allocation2 + $0xa8] sm:$0xff] 0.0
    %43 = vst [vmem:[#allocation2 + $0xb0] sm:$0xff] 0.0
    %44 = vst [vmem:[#allocation2 + $0xb8] sm:$0xff] 0.0
    %45 = vst [vmem:[#allocation2 + $0xc0] sm:$0xff] 0.0
    %46 = vst [vmem:[#allocation2 + $0xc8] sm:$0xff] 0.0
    %47 = vst [vmem:[#allocation2 + $0xd0] sm:$0xff] 0.0
    %48 = vst [vmem:[#allocation2 + $0xd8] sm:$0xff] 0.0
    %49 = vst [vmem:[#allocation2 + $0xe0] sm:$0xff] 0.0
    %50 = vst [vmem:[#allocation2 + $0xe8] sm:$0xff] 0.0
    %51 = vst [vmem:[#allocation2 + $0xf0] sm:$0xff] 0.0
    %52 = vst [vmem:[#allocation2 + $0xf8] sm:$0xff] 0.0
    %53 = vst [vmem:[#allocation2 + $0x100] sm:$0xff] 0.0
    %54 = vst [vmem:[#allocation2 + $0x108] sm:$0xff] 0.0
    %55 = vst [vmem:[#allocation2 + $0x110] sm:$0xff] 0.0
    %56 = vst [vmem:[#allocation2 + $0x118] sm:$0xff] 0.0
    %57 = vst [vmem:[#allocation2 + $0x120] sm:$0xff] 0.0
    %58 = vst [vmem:[#allocation2 + $0x128] sm:$0xff] 0.0
    %59 = vst [vmem:[#allocation2 + $0x130] sm:$0xff] 0.0
    %60 = vst [vmem:[#allocation2 + $0x138] sm:$0xff] 0.0
    %61 = vst [vmem:[#allocation2 + $0x140] sm:$0xff] 0.0
    %62 = vst [vmem:[#allocation2 + $0x148] sm:$0xff] 0.0
    %63 = vst [vmem:[#allocation2 + $0x150] sm:$0xff] 0.0
    %64 = vst [vmem:[#allocation2 + $0x158] sm:$0xff] 0.0
    %65 = vst [vmem:[#allocation2 + $0x160] sm:$0xff] 0.0
    %66 = vst [vmem:[#allocation2 + $0x168] sm:$0xff] 0.0
    %67 = vst [vmem:[#allocation2 + $0x170] sm:$0xff] 0.0
    %68 = vst [vmem:[#allocation2 + $0x178] sm:$0xff] 0.0
    %69 = vst [vmem:[#allocation2 + $0x180] sm:$0xff] 0.0
    %70 = vst [vmem:[#allocation2 + $0x188] sm:$0xff] 0.0
    %71 = vst [vmem:[#allocation2 + $0x190] sm:$0xff] 0.0
    %72 = vst [vmem:[#allocation2 + $0x198] sm:$0xff] 0.0
    %73 = vst [vmem:[#allocation2 + $0x1a0] sm:$0xff] 0.0
    %74 = vst [vmem:[#allocation2 + $0x1a8] sm:$0xff] 0.0
    %75 = vst [vmem:[#allocation2 + $0x1b0] sm:$0xff] 0.0
    %76 = vst [vmem:[#allocation2 + $0x1b8] sm:$0xff] 0.0
    %77 = vst [vmem:[#allocation2 + $0x1c0] sm:$0xff] 0.0
    %78 = vst [vmem:[#allocation2 + $0x1c8] sm:$0xff] 0.0
    %79 = vst [vmem:[#allocation2 + $0x1d0] sm:$0xff] 0.0
    %80 = vst [vmem:[#allocation2 + $0x1d8] sm:$0xff] 0.0
    %81 = vst [vmem:[#allocation2 + $0x1e0] sm:$0xff] 0.0
    %82 = vst [vmem:[#allocation2 + $0x1e8] sm:$0xff] 0.0
    %83 = vst [vmem:[#allocation2 + $0x1f0] sm:$0xff] 0.0
    %84 = vst [vmem:[#allocation2 + $0x1f8] sm:$0xff] 0.0
  $region21: #{_matmul_core.1} parent=0 // pred_fallthru
    _
  %v85 = vld [vmem:[%s0] sm:$0xff]
  %v86 = vld [vmem:[%s0 + $0x8] sm:$0xff]
  %v87 = vld [vmem:[%s0 + $0x10] sm:$0xff]
  %v88 = vld [vmem:[%s0 + $0x18] sm:$0xff]
  %v89 = vld [vmem:[%s0 + $0x20] sm:$0xff]
  %v90 = vld [vmem:[%s0 + $0x28] sm:$0xff]
  %v91 = vld [vmem:[%s0 + $0x30] sm:$0xff]
  %v92 = vld [vmem:[%s0 + $0x38] sm:$0xff]
  %v93 = vld [vmem:[%s0 + $0x40] sm:$0xff]
  %v94 = vld [vmem:[%s0 + $0x48] sm:$0xff]
  %v95 = vld [vmem:[%s0 + $0x50] sm:$0xff]
  %v96 = vld [vmem:[%s0 + $0x58] sm:$0xff]
  %v97 = vld [vmem:[%s0 + $0x60] sm:$0xff]
  %v98 = vld [vmem:[%s0 + $0x68] sm:$0xff]
  %v99 = vld [vmem:[%s0 + $0x70] sm:$0xff]
  %v100 = vld [vmem:[%s0 + $0x78] sm:$0xff]
  %v101 = vld [vmem:[%s0 + $0x80] sm:$0xff]
  %v102 = vld [vmem:[%s0 + $0x88] sm:$0xff]
  %v103 = vld [vmem:[%s0 + $0x90] sm:$0xff]
  %v104 = vld [vmem:[%s0 + $0x98] sm:$0xff]
  %v105 = vld [vmem:[%s0 + $0xa0] sm:$0xff]
  %v106 = vld [vmem:[%s0 + $0xa8] sm:$0xff]
  %v107 = vld [vmem:[%s0 + $0xb0] sm:$0xff]
  %v108 = vld [vmem:[%s0 + $0xb8] sm:$0xff]
  %v109 = vld [vmem:[%s0 + $0xc0] sm:$0xff]
  %v110 = vld [vmem:[%s0 + $0xc8] sm:$0xff]
  %v111 = vld [vmem:[%s0 + $0xd0] sm:$0xff]
  %v112 = vld [vmem:[%s0 + $0xd8] sm:$0xff]
  %v113 = vld [vmem:[%s0 + $0xe0] sm:$0xff]
  %v114 = vld [vmem:[%s0 + $0xe8] sm:$0xff]
  %v115 = vld [vmem:[%s0 + $0xf0] sm:$0xff]
  %v116 = vld [vmem:[%s0 + $0xf8] sm:$0xff]
  %v117 = vld [vmem:[#allocation2] sm:$0xff]
  %v118 = vld [vmem:[#allocation2 + $0x8] sm:$0xff]
  %v119 = vld [vmem:[#allocation2 + $0x10] sm:$0xff]
  %v120 = vld [vmem:[#allocation2 + $0x18] sm:$0xff]
  %v121 = vld [vmem:[#allocation2 + $0x20] sm:$0xff]
  %v122 = vld [vmem:[#allocation2 + $0x28] sm:$0xff]
  %v123 = vld [vmem:[#allocation2 + $0x30] sm:$0xff]
  %v124 = vld [vmem:[#allocation2 + $0x38] sm:$0xff]
  %v125 = vld [vmem:[#allocation2 + $0x40] sm:$0xff]
  %v126 = vld [vmem:[#allocation2 + $0x48] sm:$0xff]
  %v127 = vld [vmem:[#allocation2 + $0x50] sm:$0xff]
  %v128 = vld [vmem:[#allocation2 + $0x58] sm:$0xff]
  %v129 = vld [vmem:[#allocation2 + $0x60] sm:$0xff]
  %v130 = vld [vmem:[#allocation2 + $0x68] sm:$0xff]
  %v131 = vld [vmem:[#allocation2 + $0x70] sm:$0xff]
  %v132 = vld [vmem:[#allocation2 + $0x78] sm:$0xff]
  %v133 = vld [vmem:[#allocation2 + $0x80] sm:$0xff]
  %v134 = vld [vmem:[#allocation2 + $0x88] sm:$0xff]
  %v135 = vld [vmem:[#allocation2 + $0x90] sm:$0xff]
  %v136 = vld [vmem:[#allocation2 + $0x98] sm:$0xff]
  %v137 = vld [vmem:[#allocation2 + $0xa0] sm:$0xff]
  %v138 = vld [vmem:[#allocation2 + $0xa8] sm:$0xff]
  %v139 = vld [vmem:[#allocation2 + $0xb0] sm:$0xff]
  %v140 = vld [vmem:[#allocation2 + $0xb8] sm:$0xff]
  %v141 = vld [vmem:[#allocation2 + $0xc0] sm:$0xff]
  %v142 = vld [vmem:[#allocation2 + $0xc8] sm:$0xff]
  %v143 = vld [vmem:[#allocation2 + $0xd0] sm:$0xff]
  %v144 = vld [vmem:[#allocation2 + $0xd8] sm:$0xff]
  %v145 = vld [vmem:[#allocation2 + $0xe0] sm:$0xff]
  %v146 = vld [vmem:[#allocation2 + $0xe8] sm:$0xff]
  %v147 = vld [vmem:[#allocation2 + $0xf0] sm:$0xff]
  %v148 = vld [vmem:[#allocation2 + $0xf8] sm:$0xff]
  %v149 = vld [vmem:[#allocation2 + $0x100] sm:$0xff]
  %v150 = vld [vmem:[#allocation2 + $0x108] sm:$0xff]
  %v151 = vld [vmem:[#allocation2 + $0x110] sm:$0xff]
  %v152 = vld [vmem:[#allocation2 + $0x118] sm:$0xff]
  %v153 = vld [vmem:[#allocation2 + $0x120] sm:$0xff]
  %v154 = vld [vmem:[#allocation2 + $0x128] sm:$0xff]
  %v155 = vld [vmem:[#allocation2 + $0x130] sm:$0xff]
  %v156 = vld [vmem:[#allocation2 + $0x138] sm:$0xff]
  %v157 = vld [vmem:[#allocation2 + $0x140] sm:$0xff]
  %v158 = vld [vmem:[#allocation2 + $0x148] sm:$0xff]
  %v159 = vld [vmem:[#allocation2 + $0x150] sm:$0xff]
  %v160 = vld [vmem:[#allocation2 + $0x158] sm:$0xff]
  %v161 = vld [vmem:[#allocation2 + $0x160] sm:$0xff]
  %v162 = vld [vmem:[#allocation2 + $0x168] sm:$0xff]
  %v163 = vld [vmem:[#allocation2 + $0x170] sm:$0xff]
  %v164 = vld [vmem:[#allocation2 + $0x178] sm:$0xff]
  %v165 = vld [vmem:[#allocation2 + $0x180] sm:$0xff]
  %v166 = vld [vmem:[#allocation2 + $0x188] sm:$0xff]
  %v167 = vld [vmem:[#allocation2 + $0x190] sm:$0xff]
  %v168 = vld [vmem:[#allocation2 + $0x198] sm:$0xff]
  %v169 = vld [vmem:[#allocation2 + $0x1a0] sm:$0xff]
  %v170 = vld [vmem:[#allocation2 + $0x1a8] sm:$0xff]
  %v171 = vld [vmem:[#allocation2 + $0x1b0] sm:$0xff]
  %v172 = vld [vmem:[#allocation2 + $0x1b8] sm:$0xff]
  %v173 = vld [vmem:[#allocation2 + $0x1c0] sm:$0xff]
  %v174 = vld [vmem:[#allocation2 + $0x1c8] sm:$0xff]
  %v175 = vld [vmem:[#allocation2 + $0x1d0] sm:$0xff]
  %v176 = vld [vmem:[#allocation2 + $0x1d8] sm:$0xff]
  %v177 = vld [vmem:[#allocation2 + $0x1e0] sm:$0xff]
  %v178 = vld [vmem:[#allocation2 + $0x1e8] sm:$0xff]
  %v179 = vld [vmem:[#allocation2 + $0x1f0] sm:$0xff]
  %v180 = vld [vmem:[#allocation2 + $0x1f8] sm:$0xff]
  %v181 = vld [vmem:[%s1] sm:$0xff]
  %v182 = vld [vmem:[%s1 + $0x8] sm:$0xff]
  %v183 = vld [vmem:[%s1 + $0x10] sm:$0xff]
  %v184 = vld [vmem:[%s1 + $0x18] sm:$0xff]
  %v185 = vld [vmem:[%s1 + $0x20] sm:$0xff]
  %v186 = vld [vmem:[%s1 + $0x28] sm:$0xff]
  %v187 = vld [vmem:[%s1 + $0x30] sm:$0xff]
  %v188 = vld [vmem:[%s1 + $0x38] sm:$0xff]
  %v189 = vld [vmem:[%s1 + $0x40] sm:$0xff]
  %v190 = vld [vmem:[%s1 + $0x48] sm:$0xff]
  %v191 = vld [vmem:[%s1 + $0x50] sm:$0xff]
  %v192 = vld [vmem:[%s1 + $0x58] sm:$0xff]
  %v193 = vld [vmem:[%s1 + $0x60] sm:$0xff]
  %v194 = vld [vmem:[%s1 + $0x68] sm:$0xff]
  %v195 = vld [vmem:[%s1 + $0x70] sm:$0xff]
  %v196 = vld [vmem:[%s1 + $0x78] sm:$0xff]
  %v197 = vld [vmem:[%s1 + $0x80] sm:$0xff]
  %v198 = vld [vmem:[%s1 + $0x88] sm:$0xff]
  %v199 = vld [vmem:[%s1 + $0x90] sm:$0xff]
  %v200 = vld [vmem:[%s1 + $0x98] sm:$0xff]
  %v201 = vld [vmem:[%s1 + $0xa0] sm:$0xff]
  %v202 = vld [vmem:[%s1 + $0xa8] sm:$0xff]
  %v203 = vld [vmem:[%s1 + $0xb0] sm:$0xff]
  %v204 = vld [vmem:[%s1 + $0xb8] sm:$0xff]
  %v205 = vld [vmem:[%s1 + $0xc0] sm:$0xff]
  %v206 = vld [vmem:[%s1 + $0xc8] sm:$0xff]
  %v207 = vld [vmem:[%s1 + $0xd0] sm:$0xff]
  %v208 = vld [vmem:[%s1 + $0xd8] sm:$0xff]
  %v209 = vld [vmem:[%s1 + $0xe0] sm:$0xff]
  %v210 = vld [vmem:[%s1 + $0xe8] sm:$0xff]
  %v211 = vld [vmem:[%s1 + $0xf0] sm:$0xff]
  %v212 = vld [vmem:[%s1 + $0xf8] sm:$0xff]
  %v245 = vunpack.c.l.b16 %v85
  %v246 = vunpack.c.h.b16 %v85
  %v247 = vunpack.c.l.b16 %v86
  %v248 = vunpack.c.h.b16 %v86
  %v249 = vunpack.c.l.b16 %v87
  %v250 = vunpack.c.h.b16 %v87
  %v251 = vunpack.c.l.b16 %v88
  %v252 = vunpack.c.h.b16 %v88
  %v253 = vunpack.c.l.b16 %v89
  %v254 = vunpack.c.h.b16 %v89
  %v255 = vunpack.c.l.b16 %v90
  %v256 = vunpack.c.h.b16 %v90
  %v257 = vunpack.c.l.b16 %v91
  %v258 = vunpack.c.h.b16 %v91
  %v259 = vunpack.c.l.b16 %v92
  %v260 = vunpack.c.h.b16 %v92
  %v261 = vunpack.c.l.b16 %v93
  %v262 = vunpack.c.h.b16 %v93
  %v263 = vunpack.c.l.b16 %v94
  %v264 = vunpack.c.h.b16 %v94
  %v265 = vunpack.c.l.b16 %v95
  %v266 = vunpack.c.h.b16 %v95
  %v267 = vunpack.c.l.b16 %v96
  %v268 = vunpack.c.h.b16 %v96
  %v269 = vunpack.c.l.b16 %v97
  %v270 = vunpack.c.h.b16 %v97
  %v271 = vunpack.c.l.b16 %v98
  %v272 = vunpack.c.h.b16 %v98
  %v273 = vunpack.c.l.b16 %v99
  %v274 = vunpack.c.h.b16 %v99
  %v275 = vunpack.c.l.b16 %v100
  %v276 = vunpack.c.h.b16 %v100
  %v277 = vunpack.c.l.b16 %v101
  %v278 = vunpack.c.h.b16 %v101
  %v279 = vunpack.c.l.b16 %v102
  %v280 = vunpack.c.h.b16 %v102
  %v281 = vunpack.c.l.b16 %v103
  %v282 = vunpack.c.h.b16 %v103
  %v283 = vunpack.c.l.b16 %v104
  %v284 = vunpack.c.h.b16 %v104
  %v285 = vunpack.c.l.b16 %v105
  %v286 = vunpack.c.h.b16 %v105
  %v287 = vunpack.c.l.b16 %v106
  %v288 = vunpack.c.h.b16 %v106
  %v289 = vunpack.c.l.b16 %v107
  %v290 = vunpack.c.h.b16 %v107
  %v291 = vunpack.c.l.b16 %v108
  %v292 = vunpack.c.h.b16 %v108
  %v293 = vunpack.c.l.b16 %v109
  %v294 = vunpack.c.h.b16 %v109
  %v295 = vunpack.c.l.b16 %v110
  %v296 = vunpack.c.h.b16 %v110
  %v297 = vunpack.c.l.b16 %v111
  %v298 = vunpack.c.h.b16 %v111
  %v299 = vunpack.c.l.b16 %v112
  %v300 = vunpack.c.h.b16 %v112
  %v301 = vunpack.c.l.b16 %v113
  %v302 = vunpack.c.h.b16 %v113
  %v303 = vunpack.c.l.b16 %v114
  %v304 = vunpack.c.h.b16 %v114
  %v305 = vunpack.c.l.b16 %v115
  %v306 = vunpack.c.h.b16 %v115
  %v307 = vunpack.c.l.b16 %v116
  %v308 = vunpack.c.h.b16 %v116
  %v309 = vpack.c.b16 %v247, %v245
  %v310 = vpack.c.b16 %v248, %v246
  %v311 = vpack.c.b16 %v251, %v249
  %v312 = vpack.c.b16 %v252, %v250
  %v313 = vpack.c.b16 %v255, %v253
  %v314 = vpack.c.b16 %v256, %v254
  %v315 = vpack.c.b16 %v259, %v257
  %v316 = vpack.c.b16 %v260, %v258
  %v317 = vpack.c.b16 %v263, %v261
  %v318 = vpack.c.b16 %v264, %v262
  %v319 = vpack.c.b16 %v267, %v265
  %v320 = vpack.c.b16 %v268, %v266
  %v321 = vpack.c.b16 %v271, %v269
  %v322 = vpack.c.b16 %v272, %v270
  %v323 = vpack.c.b16 %v275, %v273
  %v324 = vpack.c.b16 %v276, %v274
  %v325 = vpack.c.b16 %v279, %v277
  %v326 = vpack.c.b16 %v280, %v278
  %v327 = vpack.c.b16 %v283, %v281
  %v328 = vpack.c.b16 %v284, %v282
  %v329 = vpack.c.b16 %v287, %v285
  %v330 = vpack.c.b16 %v288, %v286
  %v331 = vpack.c.b16 %v291, %v289
  %v332 = vpack.c.b16 %v292, %v290
  %v333 = vpack.c.b16 %v295, %v293
  %v334 = vpack.c.b16 %v296, %v294
  %v335 = vpack.c.b16 %v299, %v297
  %v336 = vpack.c.b16 %v300, %v298
  %v337 = vpack.c.b16 %v303, %v301
  %v338 = vpack.c.b16 %v304, %v302
  %v339 = vpack.c.b16 %v307, %v305
  %v340 = vpack.c.b16 %v308, %v306
  %v405 = vunpack.c.l.b16 %v181
  %v406 = vunpack.c.h.b16 %v181
  %v407 = vunpack.c.l.b16 %v182
  %v408 = vunpack.c.h.b16 %v182
  %v409 = vunpack.c.l.b16 %v183
  %v410 = vunpack.c.h.b16 %v183
  %v411 = vunpack.c.l.b16 %v184
  %v412 = vunpack.c.h.b16 %v184
  %v413 = vunpack.c.l.b16 %v185
  %v414 = vunpack.c.h.b16 %v185
  %v415 = vunpack.c.l.b16 %v186
  %v416 = vunpack.c.h.b16 %v186
  %v417 = vunpack.c.l.b16 %v187
  %v418 = vunpack.c.h.b16 %v187
  %v419 = vunpack.c.l.b16 %v188
  %v420 = vunpack.c.h.b16 %v188
  %v421 = vunpack.c.l.b16 %v189
  %v422 = vunpack.c.h.b16 %v189
  %v423 = vunpack.c.l.b16 %v190
  %v424 = vunpack.c.h.b16 %v190
  %v425 = vunpack.c.l.b16 %v191
  %v426 = vunpack.c.h.b16 %v191
  %v427 = vunpack.c.l.b16 %v192
  %v428 = vunpack.c.h.b16 %v192
  %v429 = vunpack.c.l.b16 %v193
  %v430 = vunpack.c.h.b16 %v193
  %v431 = vunpack.c.l.b16 %v194
  %v432 = vunpack.c.h.b16 %v194
  %v433 = vunpack.c.l.b16 %v195
  %v434 = vunpack.c.h.b16 %v195
  %v435 = vunpack.c.l.b16 %v196
  %v436 = vunpack.c.h.b16 %v196
  %v437 = vunpack.c.l.b16 %v197
  %v438 = vunpack.c.h.b16 %v197
  %v439 = vunpack.c.l.b16 %v198
  %v440 = vunpack.c.h.b16 %v198
  %v441 = vunpack.c.l.b16 %v199
  %v442 = vunpack.c.h.b16 %v199
  %v443 = vunpack.c.l.b16 %v200
  %v444 = vunpack.c.h.b16 %v200
  %v445 = vunpack.c.l.b16 %v201
  %v446 = vunpack.c.h.b16 %v201
  %v447 = vunpack.c.l.b16 %v202
  %v448 = vunpack.c.h.b16 %v202
  %v449 = vunpack.c.l.b16 %v203
  %v450 = vunpack.c.h.b16 %v203
  %v451 = vunpack.c.l.b16 %v204
  %v452 = vunpack.c.h.b16 %v204
  %v453 = vunpack.c.l.b16 %v205
  %v454 = vunpack.c.h.b16 %v205
  %v455 = vunpack.c.l.b16 %v206
  %v456 = vunpack.c.h.b16 %v206
  %v457 = vunpack.c.l.b16 %v207
  %v458 = vunpack.c.h.b16 %v207
  %v459 = vunpack.c.l.b16 %v208
  %v460 = vunpack.c.h.b16 %v208
  %v461 = vunpack.c.l.b16 %v209
  %v462 = vunpack.c.h.b16 %v209
  %v463 = vunpack.c.l.b16 %v210
  %v464 = vunpack.c.h.b16 %v210
  %v465 = vunpack.c.l.b16 %v211
  %v466 = vunpack.c.h.b16 %v211
  %v467 = vunpack.c.l.b16 %v212
  %v468 = vunpack.c.h.b16 %v212
  %v469 = vpack.c.b16 %v407, %v405
  %v470 = vpack.c.b16 %v408, %v406
  %v471 = vpack.c.b16 %v411, %v409
  %v472 = vpack.c.b16 %v412, %v410
  %v473 = vpack.c.b16 %v415, %v413
  %v474 = vpack.c.b16 %v416, %v414
  %v475 = vpack.c.b16 %v419, %v417
  %v476 = vpack.c.b16 %v420, %v418
  %v477 = vpack.c.b16 %v423, %v421
  %v478 = vpack.c.b16 %v424, %v422
  %v479 = vpack.c.b16 %v427, %v425
  %v480 = vpack.c.b16 %v428, %v426
  %v481 = vpack.c.b16 %v431, %v429
  %v482 = vpack.c.b16 %v432, %v430
  %v483 = vpack.c.b16 %v435, %v433
  %v484 = vpack.c.b16 %v436, %v434
  %v485 = vpack.c.b16 %v439, %v437
  %v486 = vpack.c.b16 %v440, %v438
  %v487 = vpack.c.b16 %v443, %v441
  %v488 = vpack.c.b16 %v444, %v442
  %v489 = vpack.c.b16 %v447, %v445
  %v490 = vpack.c.b16 %v448, %v446
  %v491 = vpack.c.b16 %v451, %v449
  %v492 = vpack.c.b16 %v452, %v450
  %v493 = vpack.c.b16 %v455, %v453
  %v494 = vpack.c.b16 %v456, %v454
  %v495 = vpack.c.b16 %v459, %v457
  %v496 = vpack.c.b16 %v460, %v458
  %v497 = vpack.c.b16 %v463, %v461
  %v498 = vpack.c.b16 %v464, %v462
  %v499 = vpack.c.b16 %v467, %v465
  %v500 = vpack.c.b16 %v468, %v466
  %533 = vmatprep.subr.bf16.mxu0 %v470
  %534 = vmatpush1.bf16.msra.mxu0 %v469
  %535 = vmatprep.subr.bf16.mxu0 %v472
  %536 = vmatpush1.bf16.msra.mxu0 %v471
  %537 = vmatprep.subr.bf16.mxu0 %v474
  %538 = vmatpush1.bf16.msra.mxu0 %v473
  %539 = vmatprep.subr.bf16.mxu0 %v476
  %540 = vmatpush1.bf16.msra.mxu0 %v475
  %541 = vmatprep.subr.bf16.mxu0 %v478
  %542 = vmatpush1.bf16.msra.mxu0 %v477
  %543 = vmatprep.subr.bf16.mxu0 %v480
  %544 = vmatpush1.bf16.msra.mxu0 %v479
  %545 = vmatprep.subr.bf16.mxu0 %v482
  %546 = vmatpush1.bf16.msra.mxu0 %v481
  %547 = vmatprep.subr.bf16.mxu0 %v484
  %548 = vmatpush1.bf16.msra.mxu0 %v483
  %549 = vmatprep.subr.bf16.mxu0 %v486
  %550 = vmatpush1.bf16.msra.mxu0 %v485
  %551 = vmatprep.subr.bf16.mxu0 %v488
  %552 = vmatpush1.bf16.msra.mxu0 %v487
  %553 = vmatprep.subr.bf16.mxu0 %v490
  %554 = vmatpush1.bf16.msra.mxu0 %v489
  %555 = vmatprep.subr.bf16.mxu0 %v492
  %556 = vmatpush1.bf16.msra.mxu0 %v491
  %557 = vmatprep.subr.bf16.mxu0 %v494
  %558 = vmatpush1.bf16.msra.mxu0 %v493
  %559 = vmatprep.subr.bf16.mxu0 %v496
  %560 = vmatpush1.bf16.msra.mxu0 %v495
  %561 = vmatprep.subr.bf16.mxu0 %v498
  %562 = vmatpush1.bf16.msra.mxu0 %v497
  %563 = vmatprep.subr.bf16.mxu0 %v500
  %564 = vmatpush1.bf16.msra.mxu0 %v499
  %565 = vmatprep.mubr.bf16.mxu0 %v310
  %566 = vmatmul.mubr.bf16.gmra.mrb[0].mxu0 %v309
  %v567 = vpop.f32.mrb[0].mxu0
  %v568 = vadd.f32 0.0, %v567
  %v569 = vpop.f32.mrb[0].mxu0
  %v570 = vadd.f32 0.0, %v569
  %v571 = vpop.f32.mrb[0].mxu0
  %v572 = vadd.f32 0.0, %v571
  %v573 = vpop.f32.mrb[0].mxu0
  %v574 = vadd.f32 0.0, %v573
  %575 = vmatprep.mubr.bf16.mxu0 %v312
  %576 = vmatmul.mubr.bf16.gmra.mrb[0].mxu0 %v311
  %v577 = vpop.f32.mrb[0].mxu0
  %v578 = vadd.f32 0.0, %v577
  %v579 = vpop.f32.mrb[0].mxu0
  %v580 = vadd.f32 0.0, %v579
  %v581 = vpop.f32.mrb[0].mxu0
  %v582 = vadd.f32 0.0, %v581
  %v583 = vpop.f32.mrb[0].mxu0
  %v584 = vadd.f32 0.0, %v583
  %585 = vmatprep.mubr.bf16.mxu0 %v314
  %586 = vmatmul.mubr.bf16.gmra.mrb[0].mxu0 %v313
  %v587 = vpop.f32.mrb[0].mxu0
  %v588 = vadd.f32 0.0, %v587
  %v589 = vpop.f32.mrb[0].mxu0
  %v590 = vadd.f32 0.0, %v589
  %v591 = vpop.f32.mrb[0].mxu0
  %v592 = vadd.f32 0.0, %v591
  %v593 = vpop.f32.mrb[0].mxu0
  %v594 = vadd.f32 0.0, %v593
  %595 = vmatprep.mubr.bf16.mxu0 %v316
  %596 = vmatmul.mubr.bf16.gmra.mrb[0].mxu0 %v315
  %v597 = vpop.f32.mrb[0].mxu0
  %v598 = vadd.f32 0.0, %v597
  %v599 = vpop.f32.mrb[0].mxu0
  %v600 = vadd.f32 0.0, %v599
  %v601 = vpop.f32.mrb[0].mxu0
  %v602 = vadd.f32 0.0, %v601
  %v603 = vpop.f32.mrb[0].mxu0
  %v604 = vadd.f32 0.0, %v603
  %605 = vmatprep.mubr.bf16.mxu0 %v318
  %606 = vmatmul.mubr.bf16.gmra.mrb[0].mxu0 %v317
  %v607 = vpop.f32.mrb[0].mxu0
  %v608 = vadd.f32 0.0, %v607
  %v609 = vpop.f32.mrb[0].mxu0
  %v610 = vadd.f32 0.0, %v609
  %v611 = vpop.f32.mrb[0].mxu0
  %v612 = vadd.f32 0.0, %v611
  %v613 = vpop.f32.mrb[0].mxu0
  %v614 = vadd.f32 0.0, %v613
  %615 = vmatprep.mubr.bf16.mxu0 %v320
  %616 = vmatmul.mubr.bf16.gmra.mrb[0].mxu0 %v319
  %v617 = vpop.f32.mrb[0].mxu0
  %v618 = vadd.f32 0.0, %v617
  %v619 = vpop.f32.mrb[0].mxu0
  %v620 = vadd.f32 0.0, %v619
  %v621 = vpop.f32.mrb[0].mxu0
  %v622 = vadd.f32 0.0, %v621
  %v623 = vpop.f32.mrb[0].mxu0
  %v624 = vadd.f32 0.0, %v623
  %625 = vmatprep.mubr.bf16.mxu0 %v322
  %626 = vmatmul.mubr.bf16.gmra.mrb[0].mxu0 %v321
  %v627 = vpop.f32.mrb[0].mxu0
  %v628 = vadd.f32 0.0, %v627
  %v629 = vpop.f32.mrb[0].mxu0
  %v630 = vadd.f32 0.0, %v629
  %v631 = vpop.f32.mrb[0].mxu0
  %v632 = vadd.f32 0.0, %v631
  %v633 = vpop.f32.mrb[0].mxu0
  %v634 = vadd.f32 0.0, %v633
  %635 = vmatprep.mubr.bf16.mxu0 %v324
  %636 = vmatmul.mubr.bf16.gmra.mrb[0].mxu0 %v323
  %v637 = vpop.f32.mrb[0].mxu0
  %v638 = vadd.f32 0.0, %v637
  %v639 = vpop.f32.mrb[0].mxu0
  %v640 = vadd.f32 0.0, %v639
  %v641 = vpop.f32.mrb[0].mxu0
  %v642 = vadd.f32 0.0, %v641
  %v643 = vpop.f32.mrb[0].mxu0
  %v644 = vadd.f32 0.0, %v643
  %645 = vmatprep.mubr.bf16.mxu0 %v326
  %646 = vmatmul.mubr.bf16.gmra.mrb[0].mxu0 %v325
  %v647 = vpop.f32.mrb[0].mxu0
  %v648 = vadd.f32 0.0, %v647
  %v649 = vpop.f32.mrb[0].mxu0
  %v650 = vadd.f32 0.0, %v649
  %v651 = vpop.f32.mrb[0].mxu0
  %v652 = vadd.f32 0.0, %v651
  %v653 = vpop.f32.mrb[0].mxu0
  %v654 = vadd.f32 0.0, %v653
  %655 = vmatprep.mubr.bf16.mxu0 %v328
  %656 = vmatmul.mubr.bf16.gmra.mrb[0].mxu0 %v327
  %v657 = vpop.f32.mrb[0].mxu0
  %v658 = vadd.f32 0.0, %v657
  %v659 = vpop.f32.mrb[0].mxu0
  %v660 = vadd.f32 0.0, %v659
  %v661 = vpop.f32.mrb[0].mxu0
  %v662 = vadd.f32 0.0, %v661
  %v663 = vpop.f32.mrb[0].mxu0
  %v664 = vadd.f32 0.0, %v663
  %665 = vmatprep.mubr.bf16.mxu0 %v330
  %666 = vmatmul.mubr.bf16.gmra.mrb[0].mxu0 %v329
  %v667 = vpop.f32.mrb[0].mxu0
  %v668 = vadd.f32 0.0, %v667
  %v669 = vpop.f32.mrb[0].mxu0
  %v670 = vadd.f32 0.0, %v669
  %v671 = vpop.f32.mrb[0].mxu0
  %v672 = vadd.f32 0.0, %v671
  %v673 = vpop.f32.mrb[0].mxu0
  %v674 = vadd.f32 0.0, %v673
  %675 = vmatprep.mubr.bf16.mxu0 %v332
  %676 = vmatmul.mubr.bf16.gmra.mrb[0].mxu0 %v331
  %v677 = vpop.f32.mrb[0].mxu0
  %v678 = vadd.f32 0.0, %v677
  %v679 = vpop.f32.mrb[0].mxu0
  %v680 = vadd.f32 0.0, %v679
  %v681 = vpop.f32.mrb[0].mxu0
  %v682 = vadd.f32 0.0, %v681
  %v683 = vpop.f32.mrb[0].mxu0
  %v684 = vadd.f32 0.0, %v683
  %685 = vmatprep.mubr.bf16.mxu0 %v334
  %686 = vmatmul.mubr.bf16.gmra.mrb[0].mxu0 %v333
  %v687 = vpop.f32.mrb[0].mxu0
  %v688 = vadd.f32 0.0, %v687
  %v689 = vpop.f32.mrb[0].mxu0
  %v690 = vadd.f32 0.0, %v689
  %v691 = vpop.f32.mrb[0].mxu0
  %v692 = vadd.f32 0.0, %v691
  %v693 = vpop.f32.mrb[0].mxu0
  %v694 = vadd.f32 0.0, %v693
  %695 = vmatprep.mubr.bf16.mxu0 %v336
  %696 = vmatmul.mubr.bf16.gmra.mrb[0].mxu0 %v335
  %v697 = vpop.f32.mrb[0].mxu0
  %v698 = vadd.f32 0.0, %v697
  %v699 = vpop.f32.mrb[0].mxu0
  %v700 = vadd.f32 0.0, %v699
  %v701 = vpop.f32.mrb[0].mxu0
  %v702 = vadd.f32 0.0, %v701
  %v703 = vpop.f32.mrb[0].mxu0
  %v704 = vadd.f32 0.0, %v703
  %705 = vmatprep.mubr.bf16.mxu0 %v338
  %706 = vmatmul.mubr.bf16.gmra.mrb[0].mxu0 %v337
  %v707 = vpop.f32.mrb[0].mxu0
  %v708 = vadd.f32 0.0, %v707
  %v709 = vpop.f32.mrb[0].mxu0
  %v710 = vadd.f32 0.0, %v709
  %v711 = vpop.f32.mrb[0].mxu0
  %v712 = vadd.f32 0.0, %v711
  %v713 = vpop.f32.mrb[0].mxu0
  %v714 = vadd.f32 0.0, %v713
  %715 = vmatprep.mubr.bf16.mxu0 %v340
  %716 = vmatmul.mubr.bf16.gmra.mrb[0].mxu0 %v339
  %v717 = vpop.f32.mrb[0].mxu0
  %v718 = vadd.f32 0.0, %v717
  %v719 = vpop.f32.mrb[0].mxu0
  %v720 = vadd.f32 0.0, %v719
  %v721 = vpop.f32.mrb[0].mxu0
  %v722 = vadd.f32 0.0, %v721
  %v723 = vpop.f32.mrb[0].mxu0
  %v724 = vadd.f32 0.0, %v723
  %725 = vdwg.mxu0
  %v726 = vadd.f32 %v117, %v568
  %v727 = vadd.f32 %v118, %v570
  %v728 = vadd.f32 %v119, %v572
  %v729 = vadd.f32 %v120, %v574
  %v730 = vadd.f32 %v121, %v578
  %v731 = vadd.f32 %v122, %v580
  %v732 = vadd.f32 %v123, %v582
  %v733 = vadd.f32 %v124, %v584
  %v734 = vadd.f32 %v125, %v588
  %v735 = vadd.f32 %v126, %v590
  %v736 = vadd.f32 %v127, %v592
  %v737 = vadd.f32 %v128, %v594
  %v738 = vadd.f32 %v129, %v598
  %v739 = vadd.f32 %v130, %v600
  %v740 = vadd.f32 %v131, %v602
  %v741 = vadd.f32 %v132, %v604
  %v742 = vadd.f32 %v133, %v608
  %v743 = vadd.f32 %v134, %v610
  %v744 = vadd.f32 %v135, %v612
  %v745 = vadd.f32 %v136, %v614
  %v746 = vadd.f32 %v137, %v618
  %v747 = vadd.f32 %v138, %v620
  %v748 = vadd.f32 %v139, %v622
  %v749 = vadd.f32 %v140, %v624
  %v750 = vadd.f32 %v141, %v628
  %v751 = vadd.f32 %v142, %v630
  %v752 = vadd.f32 %v143, %v632
  %v753 = vadd.f32 %v144, %v634
  %v754 = vadd.f32 %v145, %v638
  %v755 = vadd.f32 %v146, %v640
  %v756 = vadd.f32 %v147, %v642
  %v757 = vadd.f32 %v148, %v644
  %v758 = vadd.f32 %v149, %v648
  %v759 = vadd.f32 %v150, %v650
  %v760 = vadd.f32 %v151, %v652
  %v761 = vadd.f32 %v152, %v654
  %v762 = vadd.f32 %v153, %v658
  %v763 = vadd.f32 %v154, %v660
  %v764 = vadd.f32 %v155, %v662
  %v765 = vadd.f32 %v156, %v664
  %v766 = vadd.f32 %v157, %v668
  %v767 = vadd.f32 %v158, %v670
  %v768 = vadd.f32 %v159, %v672
  %v769 = vadd.f32 %v160, %v674
  %v770 = vadd.f32 %v161, %v678
  %v771 = vadd.f32 %v162, %v680
  %v772 = vadd.f32 %v163, %v682
  %v773 = vadd.f32 %v164, %v684
  %v774 = vadd.f32 %v165, %v688
  %v775 = vadd.f32 %v166, %v690
  %v776 = vadd.f32 %v167, %v692
  %v777 = vadd.f32 %v168, %v694
  %v778 = vadd.f32 %v169, %v698
  %v779 = vadd.f32 %v170, %v700
  %v780 = vadd.f32 %v171, %v702
  %v781 = vadd.f32 %v172, %v704
  %v782 = vadd.f32 %v173, %v708
  %v783 = vadd.f32 %v174, %v710
  %v784 = vadd.f32 %v175, %v712
  %v785 = vadd.f32 %v176, %v714
  %v786 = vadd.f32 %v177, %v718
  %v787 = vadd.f32 %v178, %v720
  %v788 = vadd.f32 %v179, %v722
  %v789 = vadd.f32 %v180, %v724
  %790 = vst [vmem:[#allocation2] sm:$0xff] %v726
  %791 = vst [vmem:[#allocation2 + $0x8] sm:$0xff] %v727
  %792 = vst [vmem:[#allocation2 + $0x10] sm:$0xff] %v728
  %793 = vst [vmem:[#allocation2 + $0x18] sm:$0xff] %v729
  %794 = vst [vmem:[#allocation2 + $0x20] sm:$0xff] %v730
  %795 = vst [vmem:[#allocation2 + $0x28] sm:$0xff] %v731
  %796 = vst [vmem:[#allocation2 + $0x30] sm:$0xff] %v732
  %797 = vst [vmem:[#allocation2 + $0x38] sm:$0xff] %v733
  %798 = vst [vmem:[#allocation2 + $0x40] sm:$0xff] %v734
  %799 = vst [vmem:[#allocation2 + $0x48] sm:$0xff] %v735
  %800 = vst [vmem:[#allocation2 + $0x50] sm:$0xff] %v736
  %801 = vst [vmem:[#allocation2 + $0x58] sm:$0xff] %v737
  %802 = vst [vmem:[#allocation2 + $0x60] sm:$0xff] %v738
  %803 = vst [vmem:[#allocation2 + $0x68] sm:$0xff] %v739
  %804 = vst [vmem:[#allocation2 + $0x70] sm:$0xff] %v740
  %805 = vst [vmem:[#allocation2 + $0x78] sm:$0xff] %v741
  %806 = vst [vmem:[#allocation2 + $0x80] sm:$0xff] %v742
  %807 = vst [vmem:[#allocation2 + $0x88] sm:$0xff] %v743
  %808 = vst [vmem:[#allocation2 + $0x90] sm:$0xff] %v744
  %809 = vst [vmem:[#allocation2 + $0x98] sm:$0xff] %v745
  %810 = vst [vmem:[#allocation2 + $0xa0] sm:$0xff] %v746
  %811 = vst [vmem:[#allocation2 + $0xa8] sm:$0xff] %v747
  %812 = vst [vmem:[#allocation2 + $0xb0] sm:$0xff] %v748
  %813 = vst [vmem:[#allocation2 + $0xb8] sm:$0xff] %v749
  %814 = vst [vmem:[#allocation2 + $0xc0] sm:$0xff] %v750
  %815 = vst [vmem:[#allocation2 + $0xc8] sm:$0xff] %v751
  %816 = vst [vmem:[#allocation2 + $0xd0] sm:$0xff] %v752
  %817 = vst [vmem:[#allocation2 + $0xd8] sm:$0xff] %v753
  %818 = vst [vmem:[#allocation2 + $0xe0] sm:$0xff] %v754
  %819 = vst [vmem:[#allocation2 + $0xe8] sm:$0xff] %v755
  %820 = vst [vmem:[#allocation2 + $0xf0] sm:$0xff] %v756
  %821 = vst [vmem:[#allocation2 + $0xf8] sm:$0xff] %v757
  %822 = vst [vmem:[#allocation2 + $0x100] sm:$0xff] %v758
  %823 = vst [vmem:[#allocation2 + $0x108] sm:$0xff] %v759
  %824 = vst [vmem:[#allocation2 + $0x110] sm:$0xff] %v760
  %825 = vst [vmem:[#allocation2 + $0x118] sm:$0xff] %v761
  %826 = vst [vmem:[#allocation2 + $0x120] sm:$0xff] %v762
  %827 = vst [vmem:[#allocation2 + $0x128] sm:$0xff] %v763
  %828 = vst [vmem:[#allocation2 + $0x130] sm:$0xff] %v764
  %829 = vst [vmem:[#allocation2 + $0x138] sm:$0xff] %v765
  %830 = vst [vmem:[#allocation2 + $0x140] sm:$0xff] %v766
  %831 = vst [vmem:[#allocation2 + $0x148] sm:$0xff] %v767
  %832 = vst [vmem:[#allocation2 + $0x150] sm:$0xff] %v768
  %833 = vst [vmem:[#allocation2 + $0x158] sm:$0xff] %v769
  %834 = vst [vmem:[#allocation2 + $0x160] sm:$0xff] %v770
  %835 = vst [vmem:[#allocation2 + $0x168] sm:$0xff] %v771
  %836 = vst [vmem:[#allocation2 + $0x170] sm:$0xff] %v772
  %837 = vst [vmem:[#allocation2 + $0x178] sm:$0xff] %v773
  %838 = vst [vmem:[#allocation2 + $0x180] sm:$0xff] %v774
  %839 = vst [vmem:[#allocation2 + $0x188] sm:$0xff] %v775
  %840 = vst [vmem:[#allocation2 + $0x190] sm:$0xff] %v776
  %841 = vst [vmem:[#allocation2 + $0x198] sm:$0xff] %v777
  %842 = vst [vmem:[#allocation2 + $0x1a0] sm:$0xff] %v778
  %843 = vst [vmem:[#allocation2 + $0x1a8] sm:$0xff] %v779
  %844 = vst [vmem:[#allocation2 + $0x1b0] sm:$0xff] %v780
  %845 = vst [vmem:[#allocation2 + $0x1b8] sm:$0xff] %v781
  %846 = vst [vmem:[#allocation2 + $0x1c0] sm:$0xff] %v782
  %847 = vst [vmem:[#allocation2 + $0x1c8] sm:$0xff] %v783
  %848 = vst [vmem:[#allocation2 + $0x1d0] sm:$0xff] %v784
  %849 = vst [vmem:[#allocation2 + $0x1d8] sm:$0xff] %v785
  %850 = vst [vmem:[#allocation2 + $0x1e0] sm:$0xff] %v786
  %851 = vst [vmem:[#allocation2 + $0x1e8] sm:$0xff] %v787
  %852 = vst [vmem:[#allocation2 + $0x1f0] sm:$0xff] %v788
  %853 = vst [vmem:[#allocation2 + $0x1f8] sm:$0xff] %v789
  // Predicated region
  $region22: #{_matmul_core.1} parent=0 // pred_check
    %p854 = pneg %p17
  $region23: #{_matmul_core.1} parent=0 // pred_check_branch
    %856 = sbr.rel (%p854) target = $region25
  $region24: #{_matmul_core.1} parent=0 // pred_region
    %v857 = vld [vmem:[#allocation2] sm:$0xff]
    %v858 = vld [vmem:[#allocation2 + $0x8] sm:$0xff]
    %v859 = vld [vmem:[#allocation2 + $0x10] sm:$0xff]
    %v860 = vld [vmem:[#allocation2 + $0x18] sm:$0xff]
    %v861 = vld [vmem:[#allocation2 + $0x20] sm:$0xff]
    %v862 = vld [vmem:[#allocation2 + $0x28] sm:$0xff]
    %v863 = vld [vmem:[#allocation2 + $0x30] sm:$0xff]
    %v864 = vld [vmem:[#allocation2 + $0x38] sm:$0xff]
    %v865 = vld [vmem:[#allocation2 + $0x40] sm:$0xff]
    %v866 = vld [vmem:[#allocation2 + $0x48] sm:$0xff]
    %v867 = vld [vmem:[#allocation2 + $0x50] sm:$0xff]
    %v868 = vld [vmem:[#allocation2 + $0x58] sm:$0xff]
    %v869 = vld [vmem:[#allocation2 + $0x60] sm:$0xff]
    %v870 = vld [vmem:[#allocation2 + $0x68] sm:$0xff]
    %v871 = vld [vmem:[#allocation2 + $0x70] sm:$0xff]
    %v872 = vld [vmem:[#allocation2 + $0x78] sm:$0xff]
    %v873 = vld [vmem:[#allocation2 + $0x80] sm:$0xff]
    %v874 = vld [vmem:[#allocation2 + $0x88] sm:$0xff]
    %v875 = vld [vmem:[#allocation2 + $0x90] sm:$0xff]
    %v876 = vld [vmem:[#allocation2 + $0x98] sm:$0xff]
    %v877 = vld [vmem:[#allocation2 + $0xa0] sm:$0xff]
    %v878 = vld [vmem:[#allocation2 + $0xa8] sm:$0xff]
    %v879 = vld [vmem:[#allocation2 + $0xb0] sm:$0xff]
    %v880 = vld [vmem:[#allocation2 + $0xb8] sm:$0xff]
    %v881 = vld [vmem:[#allocation2 + $0xc0] sm:$0xff]
    %v882 = vld [vmem:[#allocation2 + $0xc8] sm:$0xff]
    %v883 = vld [vmem:[#allocation2 + $0xd0] sm:$0xff]
    %v884 = vld [vmem:[#allocation2 + $0xd8] sm:$0xff]
    %v885 = vld [vmem:[#allocation2 + $0xe0] sm:$0xff]
    %v886 = vld [vmem:[#allocation2 + $0xe8] sm:$0xff]
    %v887 = vld [vmem:[#allocation2 + $0xf0] sm:$0xff]
    %v888 = vld [vmem:[#allocation2 + $0xf8] sm:$0xff]
    %v889 = vld [vmem:[#allocation2 + $0x100] sm:$0xff]
    %v890 = vld [vmem:[#allocation2 + $0x108] sm:$0xff]
    %v891 = vld [vmem:[#allocation2 + $0x110] sm:$0xff]
    %v892 = vld [vmem:[#allocation2 + $0x118] sm:$0xff]
    %v893 = vld [vmem:[#allocation2 + $0x120] sm:$0xff]
    %v894 = vld [vmem:[#allocation2 + $0x128] sm:$0xff]
    %v895 = vld [vmem:[#allocation2 + $0x130] sm:$0xff]
    %v896 = vld [vmem:[#allocation2 + $0x138] sm:$0xff]
    %v897 = vld [vmem:[#allocation2 + $0x140] sm:$0xff]
    %v898 = vld [vmem:[#allocation2 + $0x148] sm:$0xff]
    %v899 = vld [vmem:[#allocation2 + $0x150] sm:$0xff]
    %v900 = vld [vmem:[#allocation2 + $0x158] sm:$0xff]
    %v901 = vld [vmem:[#allocation2 + $0x160] sm:$0xff]
    %v902 = vld [vmem:[#allocation2 + $0x168] sm:$0xff]
    %v903 = vld [vmem:[#allocation2 + $0x170] sm:$0xff]
    %v904 = vld [vmem:[#allocation2 + $0x178] sm:$0xff]
    %v905 = vld [vmem:[#allocation2 + $0x180] sm:$0xff]
    %v906 = vld [vmem:[#allocation2 + $0x188] sm:$0xff]
    %v907 = vld [vmem:[#allocation2 + $0x190] sm:$0xff]
    %v908 = vld [vmem:[#allocation2 + $0x198] sm:$0xff]
    %v909 = vld [vmem:[#allocation2 + $0x1a0] sm:$0xff]
    %v910 = vld [vmem:[#allocation2 + $0x1a8] sm:$0xff]
    %v911 = vld [vmem:[#allocation2 + $0x1b0] sm:$0xff]
    %v912 = vld [vmem:[#allocation2 + $0x1b8] sm:$0xff]
    %v913 = vld [vmem:[#allocation2 + $0x1c0] sm:$0xff]
    %v914 = vld [vmem:[#allocation2 + $0x1c8] sm:$0xff]
    %v915 = vld [vmem:[#allocation2 + $0x1d0] sm:$0xff]
    %v916 = vld [vmem:[#allocation2 + $0x1d8] sm:$0xff]
    %v917 = vld [vmem:[#allocation2 + $0x1e0] sm:$0xff]
    %v918 = vld [vmem:[#allocation2 + $0x1e8] sm:$0xff]
    %v919 = vld [vmem:[#allocation2 + $0x1f0] sm:$0xff]
    %v920 = vld [vmem:[#allocation2 + $0x1f8] sm:$0xff]
    %v921 = vld [vmem:[%s2] sm:$0x3]
    %v923 = vlaneseq
    %v924 = vshrl.u32 %v923, 7
    %v925 = vsub.s32 0, %v924
    %v926 = vrot.slane %v921, %v925
    %v927 = vlaneseq
    %v928 = vshrl.u32 %v927, 7
    %v929 = vsub.s32 1, %v928
    %v930 = vrot.slane %v921, %v929
    %v933 = vmul.f32 %v857, %v926
    %v934 = vmul.f32 %v858, %v930
    %v935 = vmul.f32 %v859, %v926
    %v936 = vmul.f32 %v860, %v930
    %v937 = vmul.f32 %v861, %v926
    %v938 = vmul.f32 %v862, %v930
    %v939 = vmul.f32 %v863, %v926
    %v940 = vmul.f32 %v864, %v930
    %v941 = vmul.f32 %v865, %v926
    %v942 = vmul.f32 %v866, %v930
    %v943 = vmul.f32 %v867, %v926
    %v944 = vmul.f32 %v868, %v930
    %v945 = vmul.f32 %v869, %v926
    %v946 = vmul.f32 %v870, %v930
    %v947 = vmul.f32 %v871, %v926
    %v948 = vmul.f32 %v872, %v930
    %v949 = vmul.f32 %v873, %v926
    %v950 = vmul.f32 %v874, %v930
    %v951 = vmul.f32 %v875, %v926
    %v952 = vmul.f32 %v876, %v930
    %v953 = vmul.f32 %v877, %v926
    %v954 = vmul.f32 %v878, %v930
    %v955 = vmul.f32 %v879, %v926
    %v956 = vmul.f32 %v880, %v930
    %v957 = vmul.f32 %v881, %v926
    %v958 = vmul.f32 %v882, %v930
    %v959 = vmul.f32 %v883, %v926
    %v960 = vmul.f32 %v884, %v930
    %v961 = vmul.f32 %v885, %v926
    %v962 = vmul.f32 %v886, %v930
    %v963 = vmul.f32 %v887, %v926
    %v964 = vmul.f32 %v888, %v930
    %v965 = vmul.f32 %v889, %v926
    %v966 = vmul.f32 %v890, %v930
    %v967 = vmul.f32 %v891, %v926
    %v968 = vmul.f32 %v892, %v930
    %v969 = vmul.f32 %v893, %v926
    %v970 = vmul.f32 %v894, %v930
    %v971 = vmul.f32 %v895, %v926
    %v972 = vmul.f32 %v896, %v930
    %v973 = vmul.f32 %v897, %v926
    %v974 = vmul.f32 %v898, %v930
    %v975 = vmul.f32 %v899, %v926
    %v976 = vmul.f32 %v900, %v930
    %v977 = vmul.f32 %v901, %v926
    %v978 = vmul.f32 %v902, %v930
    %v979 = vmul.f32 %v903, %v926
    %v980 = vmul.f32 %v904, %v930
    %v981 = vmul.f32 %v905, %v926
    %v982 = vmul.f32 %v906, %v930
    %v983 = vmul.f32 %v907, %v926
    %v984 = vmul.f32 %v908, %v930
    %v985 = vmul.f32 %v909, %v926
    %v986 = vmul.f32 %v910, %v930
    %v987 = vmul.f32 %v911, %v926
    %v988 = vmul.f32 %v912, %v930
    %v989 = vmul.f32 %v913, %v926
    %v990 = vmul.f32 %v914, %v930
    %v991 = vmul.f32 %v915, %v926
    %v992 = vmul.f32 %v916, %v930
    %v993 = vmul.f32 %v917, %v926
    %v994 = vmul.f32 %v918, %v930
    %v995 = vmul.f32 %v919, %v926
    %v996 = vmul.f32 %v920, %v930
    %v997 = vld [vmem:[%s3] sm:$0x3]
    %v999 = vlaneseq
    %v1000 = vshrl.u32 %v999, 7
    %v1001 = vsub.s32 0, %v1000
    %v1002 = vrot.slane %v997, %v1001
    %v1003 = vlaneseq
    %v1004 = vshrl.u32 %v1003, 7
    %v1005 = vsub.s32 1, %v1004
    %v1006 = vrot.slane %v997, %v1005
    %v1009 = vadd.f32 %v933, %v1002
    %v1010 = vadd.f32 %v934, %v1006
    %v1011 = vadd.f32 %v935, %v1002
    %v1012 = vadd.f32 %v936, %v1006
    %v1013 = vadd.f32 %v937, %v1002
    %v1014 = vadd.f32 %v938, %v1006
    %v1015 = vadd.f32 %v939, %v1002
    %v1016 = vadd.f32 %v940, %v1006
    %v1017 = vadd.f32 %v941, %v1002
    %v1018 = vadd.f32 %v942, %v1006
    %v1019 = vadd.f32 %v943, %v1002
    %v1020 = vadd.f32 %v944, %v1006
    %v1021 = vadd.f32 %v945, %v1002
    %v1022 = vadd.f32 %v946, %v1006
    %v1023 = vadd.f32 %v947, %v1002
    %v1024 = vadd.f32 %v948, %v1006
    %v1025 = vadd.f32 %v949, %v1002
    %v1026 = vadd.f32 %v950, %v1006
    %v1027 = vadd.f32 %v951, %v1002
    %v1028 = vadd.f32 %v952, %v1006
    %v1029 = vadd.f32 %v953, %v1002
    %v1030 = vadd.f32 %v954, %v1006
    %v1031 = vadd.f32 %v955, %v1002
    %v1032 = vadd.f32 %v956, %v1006
    %v1033 = vadd.f32 %v957, %v1002
    %v1034 = vadd.f32 %v958, %v1006
    %v1035 = vadd.f32 %v959, %v1002
    %v1036 = vadd.f32 %v960, %v1006
    %v1037 = vadd.f32 %v961, %v1002
    %v1038 = vadd.f32 %v962, %v1006
    %v1039 = vadd.f32 %v963, %v1002
    %v1040 = vadd.f32 %v964, %v1006
    %v1041 = vadd.f32 %v965, %v1002
    %v1042 = vadd.f32 %v966, %v1006
    %v1043 = vadd.f32 %v967, %v1002
    %v1044 = vadd.f32 %v968, %v1006
    %v1045 = vadd.f32 %v969, %v1002
    %v1046 = vadd.f32 %v970, %v1006
    %v1047 = vadd.f32 %v971, %v1002
    %v1048 = vadd.f32 %v972, %v1006
    %v1049 = vadd.f32 %v973, %v1002
    %v1050 = vadd.f32 %v974, %v1006
    %v1051 = vadd.f32 %v975, %v1002
    %v1052 = vadd.f32 %v976, %v1006
    %v1053 = vadd.f32 %v977, %v1002
    %v1054 = vadd.f32 %v978, %v1006
    %v1055 = vadd.f32 %v979, %v1002
    %v1056 = vadd.f32 %v980, %v1006
    %v1057 = vadd.f32 %v981, %v1002
    %v1058 = vadd.f32 %v982, %v1006
    %v1059 = vadd.f32 %v983, %v1002
    %v1060 = vadd.f32 %v984, %v1006
    %v1061 = vadd.f32 %v985, %v1002
    %v1062 = vadd.f32 %v986, %v1006
    %v1063 = vadd.f32 %v987, %v1002
    %v1064 = vadd.f32 %v988, %v1006
    %v1065 = vadd.f32 %v989, %v1002
    %v1066 = vadd.f32 %v990, %v1006
    %v1067 = vadd.f32 %v991, %v1002
    %v1068 = vadd.f32 %v992, %v1006
    %v1069 = vadd.f32 %v993, %v1002
    %v1070 = vadd.f32 %v994, %v1006
    %v1071 = vadd.f32 %v995, %v1002
    %v1072 = vadd.f32 %v996, %v1006
    %v1073 = vmax.f32 %v1009, 0.0
    %v1074 = vmax.f32 %v1010, 0.0
    %v1075 = vmax.f32 %v1011, 0.0
    %v1076 = vmax.f32 %v1012, 0.0
    %v1077 = vmax.f32 %v1013, 0.0
    %v1078 = vmax.f32 %v1014, 0.0
    %v1079 = vmax.f32 %v1015, 0.0
    %v1080 = vmax.f32 %v1016, 0.0
    %v1081 = vmax.f32 %v1017, 0.0
    %v1082 = vmax.f32 %v1018, 0.0
    %v1083 = vmax.f32 %v1019, 0.0
    %v1084 = vmax.f32 %v1020, 0.0
    %v1085 = vmax.f32 %v1021, 0.0
    %v1086 = vmax.f32 %v1022, 0.0
    %v1087 = vmax.f32 %v1023, 0.0
    %v1088 = vmax.f32 %v1024, 0.0
    %v1089 = vmax.f32 %v1025, 0.0
    %v1090 = vmax.f32 %v1026, 0.0
    %v1091 = vmax.f32 %v1027, 0.0
    %v1092 = vmax.f32 %v1028, 0.0
    %v1093 = vmax.f32 %v1029, 0.0
    %v1094 = vmax.f32 %v1030, 0.0
    %v1095 = vmax.f32 %v1031, 0.0
    %v1096 = vmax.f32 %v1032, 0.0
    %v1097 = vmax.f32 %v1033, 0.0
    %v1098 = vmax.f32 %v1034, 0.0
    %v1099 = vmax.f32 %v1035, 0.0
    %v1100 = vmax.f32 %v1036, 0.0
    %v1101 = vmax.f32 %v1037, 0.0
    %v1102 = vmax.f32 %v1038, 0.0
    %v1103 = vmax.f32 %v1039, 0.0
    %v1104 = vmax.f32 %v1040, 0.0
    %v1105 = vmax.f32 %v1041, 0.0
    %v1106 = vmax.f32 %v1042, 0.0
    %v1107 = vmax.f32 %v1043, 0.0
    %v1108 = vmax.f32 %v1044, 0.0
    %v1109 = vmax.f32 %v1045, 0.0
    %v1110 = vmax.f32 %v1046, 0.0
    %v1111 = vmax.f32 %v1047, 0.0
    %v1112 = vmax.f32 %v1048, 0.0
    %v1113 = vmax.f32 %v1049, 0.0
    %v1114 = vmax.f32 %v1050, 0.0
    %v1115 = vmax.f32 %v1051, 0.0
    %v1116 = vmax.f32 %v1052, 0.0
    %v1117 = vmax.f32 %v1053, 0.0
    %v1118 = vmax.f32 %v1054, 0.0
    %v1119 = vmax.f32 %v1055, 0.0
    %v1120 = vmax.f32 %v1056, 0.0
    %v1121 = vmax.f32 %v1057, 0.0
    %v1122 = vmax.f32 %v1058, 0.0
    %v1123 = vmax.f32 %v1059, 0.0
    %v1124 = vmax.f32 %v1060, 0.0
    %v1125 = vmax.f32 %v1061, 0.0
    %v1126 = vmax.f32 %v1062, 0.0
    %v1127 = vmax.f32 %v1063, 0.0
    %v1128 = vmax.f32 %v1064, 0.0
    %v1129 = vmax.f32 %v1065, 0.0
    %v1130 = vmax.f32 %v1066, 0.0
    %v1131 = vmax.f32 %v1067, 0.0
    %v1132 = vmax.f32 %v1068, 0.0
    %v1133 = vmax.f32 %v1069, 0.0
    %v1134 = vmax.f32 %v1070, 0.0
    %v1135 = vmax.f32 %v1071, 0.0
    %v1136 = vmax.f32 %v1072, 0.0
    %1137 = vst [vmem:[%s4] sm:$0xff] %v1073
    %1138 = vst [vmem:[%s4 + $0x8] sm:$0xff] %v1074
    %1139 = vst [vmem:[%s4 + $0x10] sm:$0xff] %v1075
    %1140 = vst [vmem:[%s4 + $0x18] sm:$0xff] %v1076
    %1141 = vst [vmem:[%s4 + $0x20] sm:$0xff] %v1077
    %1142 = vst [vmem:[%s4 + $0x28] sm:$0xff] %v1078
    %1143 = vst [vmem:[%s4 + $0x30] sm:$0xff] %v1079
    %1144 = vst [vmem:[%s4 + $0x38] sm:$0xff] %v1080
    %1145 = vst [vmem:[%s4 + $0x40] sm:$0xff] %v1081
    %1146 = vst [vmem:[%s4 + $0x48] sm:$0xff] %v1082
    %1147 = vst [vmem:[%s4 + $0x50] sm:$0xff] %v1083
    %1148 = vst [vmem:[%s4 + $0x58] sm:$0xff] %v1084
    %1149 = vst [vmem:[%s4 + $0x60] sm:$0xff] %v1085
    %1150 = vst [vmem:[%s4 + $0x68] sm:$0xff] %v1086
    %1151 = vst [vmem:[%s4 + $0x70] sm:$0xff] %v1087
    %1152 = vst [vmem:[%s4 + $0x78] sm:$0xff] %v1088
    %1153 = vst [vmem:[%s4 + $0x80] sm:$0xff] %v1089
    %1154 = vst [vmem:[%s4 + $0x88] sm:$0xff] %v1090
    %1155 = vst [vmem:[%s4 + $0x90] sm:$0xff] %v1091
    %1156 = vst [vmem:[%s4 + $0x98] sm:$0xff] %v1092
    %1157 = vst [vmem:[%s4 + $0xa0] sm:$0xff] %v1093
    %1158 = vst [vmem:[%s4 + $0xa8] sm:$0xff] %v1094
    %1159 = vst [vmem:[%s4 + $0xb0] sm:$0xff] %v1095
    %1160 = vst [vmem:[%s4 + $0xb8] sm:$0xff] %v1096
    %1161 = vst [vmem:[%s4 + $0xc0] sm:$0xff] %v1097
    %1162 = vst [vmem:[%s4 + $0xc8] sm:$0xff] %v1098
    %1163 = vst [vmem:[%s4 + $0xd0] sm:$0xff] %v1099
    %1164 = vst [vmem:[%s4 + $0xd8] sm:$0xff] %v1100
    %1165 = vst [vmem:[%s4 + $0xe0] sm:$0xff] %v1101
    %1166 = vst [vmem:[%s4 + $0xe8] sm:$0xff] %v1102
    %1167 = vst [vmem:[%s4 + $0xf0] sm:$0xff] %v1103
    %1168 = vst [vmem:[%s4 + $0xf8] sm:$0xff] %v1104
    %1169 = vst [vmem:[%s4 + $0x100] sm:$0xff] %v1105
    %1170 = vst [vmem:[%s4 + $0x108] sm:$0xff] %v1106
    %1171 = vst [vmem:[%s4 + $0x110] sm:$0xff] %v1107
    %1172 = vst [vmem:[%s4 + $0x118] sm:$0xff] %v1108
    %1173 = vst [vmem:[%s4 + $0x120] sm:$0xff] %v1109
    %1174 = vst [vmem:[%s4 + $0x128] sm:$0xff] %v1110
    %1175 = vst [vmem:[%s4 + $0x130] sm:$0xff] %v1111
    %1176 = vst [vmem:[%s4 + $0x138] sm:$0xff] %v1112
    %1177 = vst [vmem:[%s4 + $0x140] sm:$0xff] %v1113
    %1178 = vst [vmem:[%s4 + $0x148] sm:$0xff] %v1114
    %1179 = vst [vmem:[%s4 + $0x150] sm:$0xff] %v1115
    %1180 = vst [vmem:[%s4 + $0x158] sm:$0xff] %v1116
    %1181 = vst [vmem:[%s4 + $0x160] sm:$0xff] %v1117
    %1182 = vst [vmem:[%s4 + $0x168] sm:$0xff] %v1118
    %1183 = vst [vmem:[%s4 + $0x170] sm:$0xff] %v1119
    %1184 = vst [vmem:[%s4 + $0x178] sm:$0xff] %v1120
    %1185 = vst [vmem:[%s4 + $0x180] sm:$0xff] %v1121
    %1186 = vst [vmem:[%s4 + $0x188] sm:$0xff] %v1122
    %1187 = vst [vmem:[%s4 + $0x190] sm:$0xff] %v1123
    %1188 = vst [vmem:[%s4 + $0x198] sm:$0xff] %v1124
    %1189 = vst [vmem:[%s4 + $0x1a0] sm:$0xff] %v1125
    %1190 = vst [vmem:[%s4 + $0x1a8] sm:$0xff] %v1126
    %1191 = vst [vmem:[%s4 + $0x1b0] sm:$0xff] %v1127
    %1192 = vst [vmem:[%s4 + $0x1b8] sm:$0xff] %v1128
    %1193 = vst [vmem:[%s4 + $0x1c0] sm:$0xff] %v1129
    %1194 = vst [vmem:[%s4 + $0x1c8] sm:$0xff] %v1130
    %1195 = vst [vmem:[%s4 + $0x1d0] sm:$0xff] %v1131
    %1196 = vst [vmem:[%s4 + $0x1d8] sm:$0xff] %v1132
    %1197 = vst [vmem:[%s4 + $0x1e0] sm:$0xff] %v1133
    %1198 = vst [vmem:[%s4 + $0x1e8] sm:$0xff] %v1134
    %1199 = vst [vmem:[%s4 + $0x1f0] sm:$0xff] %v1135
    %1200 = vst [vmem:[%s4 + $0x1f8] sm:$0xff] %v1136
  $region25: #{_matmul_core.1} parent=0 // pred_fallthru
    _
  // Predicated region
  $region26: #{_matmul_core.1} parent=0 // pred_check
    _
  $region27: #{_matmul_core.1} parent=0 // pred_check_branch
    %1202 = sbr.rel (0) target = $region29
  $region28: #{_matmul_core.1} parent=0 // pred_region
    _
  $region29: #{_matmul_core.1} parent=0 // pred_fallthru
    _
  // Predicated region
  $region30: #{_matmul_core.1} parent=0 // pred_check
    _
  $region31: #{_matmul_core.1} parent=0 // pred_check_branch
    %1204 = sbr.rel (0) target = $region33
  $region32: #{_matmul_core.1} parent=0 // pred_region
    _
  $region33: #{_matmul_core.1} parent=0 // pred_fallthru
    _

</llo_original>
